<compile_context>
chip_gen: v6e
topology: v6e:2x2x1
jax: 0.10.0
libtpu: 0.0.40
codegen_flags: <defaults>
</compile_context>

<pallas_src>
import jax
import jax.numpy as jnp
from jax.experimental import pallas as pl
from jax.experimental.pallas import tpu as pltpu

LANE = 128
SUBLANE = 8


def _round_up(n, m):
    return ((n + m - 1) // m) * m


def make_rcnn_kernel(S, B, B_pad, Hp, K):
    pad = (K - 1) // 2
    N = S * B_pad

    def kernel(x_ref, wih_ref, whh_ref, b_ref, wtaps_ref, o_ref, y_scratch):
        # ---- Phase 1: hoisted non-recurrent input projection (one matmul) --
        # u[s*Bp + b, :] = x[s, b, :] @ W_ih^T + (b_ih + b_hh)
        u = (jnp.dot(x_ref[...], wih_ref[...],
                     preferred_element_type=jnp.float32)
             + b_ref[...])                                     # (N, Hp)

        whh = whh_ref[...]                                     # (Hp, Hp)

        # ---- Phase 2: the only truly serial part, fully unrolled -----------
        # h_t = tanh(u_t + h_{t-1} @ W_hh^T), h_0 = 0.  Each step stores its
        # result straight into VMEM scratch (bounds live ranges; the vst slot
        # is otherwise idle under the next step's MXU push).
        # NOTE: the recurrence could be made weight-stationary on the MXU via
        # pltpu.matmul_push_rhs / matmul_acc_lhs / matmul_pop to avoid
        # re-pushing whh every step; jnp.dot is kept here for robustness.
        h = jnp.zeros((B_pad, Hp), jnp.float32)
        for t in range(S):
            u_t = u[t * B_pad:(t + 1) * B_pad, :]              # static, aligned
            h = jnp.tanh(u_t + jnp.dot(h, whh,
                                       preferred_element_type=jnp.float32))
            y_scratch[t * B_pad:(t + 1) * B_pad, :] = h

        # Mask padded batch rows (b >= B) ONCE after the loop.  Those rows
        # carry non-zero recurrent state (bias-driven tanh); zeroing them is
        # REQUIRED for the global-roll conv below not to leak data between
        # timesteps.  Do not remove.
        row = jax.lax.broadcasted_iota(jnp.int32, (N, 1), 0)
        valid = (row % B_pad) < B                              # (N, 1) bool
        y = jnp.where(valid, y_scratch[...], 0.0)              # (N, Hp)

        # ---- Phase 3: GatedCNN as K accumulated matmuls on rolled views ----
        # Conv1d runs along the batch axis inside each timestep ('same' zero
        # padding).  Because B_pad >= B + pad and padded batch rows of y are
        # zero, a *global* sublane roll of the flattened (N, Hp) array never
        # mixes valid data across timesteps; rows that wrap around the array
        # ends land only in padded output rows that the wrapper discards.
        acc = jnp.zeros((N, 2 * Hp), jnp.float32)
        for k in range(K):
            shift = (pad - k) % N
            yk = y if shift == 0 else pltpu.roll(y, shift=shift, axis=0)
            acc = acc + jnp.dot(yk, wtaps_ref[k],
                                preferred_element_type=jnp.float32)

        a = acc[:, :Hp]                                        # conv branch
        g = acc[:, Hp:]                                        # gate branch
        o_ref[...] = (a * jax.nn.sigmoid(g)).astype(o_ref.dtype)

    return kernel


def rcnn_forward(x, w_ih, w_hh, b_ih, b_hh, w_cnn, w_gate):
    S, B, H = x.shape
    K = w_cnn.shape[-1]
    assert K % 2 == 1, "global-roll conv trick assumes odd kernel_size"
    pad = (K - 1) // 2

    # Lane-pad the hidden dim to 128 so every op/store is lane dense, and pad
    # the batch axis so (a) every per-timestep tile is 8-sublane aligned and
    # (b) the global conv roll cannot leak between timesteps.
    Hp = _round_up(H, LANE)
    B_pad = _round_up(B + pad, SUBLANE)

    x_p = jnp.pad(x.astype(jnp.float32),
                  ((0, 0), (0, B_pad - B), (0, Hp - H)))
    x2d = x_p.reshape(S * B_pad, Hp)

    pad_hh = ((0, Hp - H), (0, Hp - H))
    wih_t = jnp.pad(w_ih.T.astype(jnp.float32), pad_hh)       # x_t @ W_ih^T
    whh_t = jnp.pad(w_hh.T.astype(jnp.float32), pad_hh)       # h   @ W_hh^T
    bias = jnp.pad((b_ih + b_hh).reshape(1, H).astype(jnp.float32),
                   ((0, 0), (0, Hp - H)))

    # Per-tap fused conv+gate weights: w_taps[k] is (Hp, 2*Hp), columns
    # [0:Hp] = conv tap k, [Hp:2Hp] = gate tap k, rows indexed by input chan.
    def prep_tap(w):                                           # (Hout, Hin, K)
        wt = jnp.transpose(w, (2, 1, 0)).astype(jnp.float32)   # (K, Hin, Hout)
        return jnp.pad(wt, ((0, 0), (0, Hp - H), (0, Hp - H)))
    w_taps = jnp.concatenate([prep_tap(w_cnn), prep_tap(w_gate)], axis=2)

    kernel = make_rcnn_kernel(S, B, B_pad, Hp, K)
    vmem = lambda: pl.BlockSpec(memory_space=pltpu.MemorySpace.VMEM)

    out2d = pl.pallas_call(
        kernel,
        out_shape=jax.ShapeDtypeStruct((S * B_pad, Hp), jnp.float32),
        in_specs=[vmem() for _ in range(5)],
        out_specs=vmem(),
        scratch_shapes=[pltpu.VMEM((S * B_pad, Hp), jnp.float32)],
    )(x2d, wih_t, whh_t, bias, w_taps)

    return out2d.reshape(S, B_pad, Hp)[:, :B, :H].astype(x.dtype)


def rcnn_reference(x, w_ih, w_hh, b_ih, b_hh, w_cnn, w_gate):
    """Pure-JAX reference matching the PyTorch forward semantics."""
    S, B, H = x.shape
    K = w_cnn.shape[-1]
    pad = (K - 1) // 2

    def step(h, x_t):
        h_new = jnp.tanh(x_t @ w_ih.T + b_ih + h @ w_hh.T + b_hh)
        return h_new, h_new

    _, y = jax.lax.scan(step, jnp.zeros((B, H), x.dtype), x)    # (S, B, H)

    def conv(y, w):  # Conv1d over axis 1, channels on axis 2, no bias
        ypad = jnp.pad(y, ((0, 0), (pad, pad), (0, 0)))
        out = jnp.zeros((S, B, H), x.dtype)
        for k in range(K):
            out = out + jnp.einsum('sbi,oi->sbo', ypad[:, k:k + B, :], w[:, :, k])
        return out

    a = conv(y, w_cnn)
    g = jax.nn.sigmoid(conv(y, w_gate))
    return a * g


if __name__ == "__main__":
    S, B, H, K = 8, 4, 32, 3   # seq_len, batch, hidden_size, kernel_size
    key = jax.random.PRNGKey(0)
    ks = jax.random.split(key, 7)
    bound = 1.0 / (H ** 0.5)
    u = lambda k, shape: jax.random.uniform(k, shape, jnp.float32, -bound, bound)

    x = jax.random.normal(ks[0], (S, B, H), jnp.float32)
    w_ih = u(ks[1], (H, H))       # nn.RNN weight_ih_l0
    w_hh = u(ks[2], (H, H))       # nn.RNN weight_hh_l0
    b_ih = u(ks[3], (H,))
    b_hh = u(ks[4], (H,))
    w_cnn = u(ks[5], (H, H, K))   # GatedCNN.cnn Conv1d weight (out, in, k)
    w_gate = u(ks[6], (H, H, K))  # GatedCNN.gate Conv1d weight

    out = rcnn_forward(x, w_ih, w_hh, b_ih, b_hh, w_cnn, w_gate)
    out = jax.block_until_ready(out)

    ref = rcnn_reference(x, w_ih, w_hh, b_ih, b_hh, w_cnn, w_gate)
    assert out.shape == (S, B, H)
    assert jnp.allclose(out, ref, atol=1e-4, rtol=1e-4)
    print("KERNEL_OK")
</pallas_src>

<mosaic_0001>
module attributes {stable_mosaic.version = 11 : i64} {
  func.func @kernel(%arg0: memref<64x128xf32, #tpu.memory_space<vmem>>, %arg1: memref<128x128xf32, #tpu.memory_space<vmem>>, %arg2: memref<128x128xf32, #tpu.memory_space<vmem>>, %arg3: memref<1x128xf32, #tpu.memory_space<vmem>>, %arg4: memref<3x128x256xf32, #tpu.memory_space<vmem>>, %arg5: memref<64x128xf32, #tpu.memory_space<vmem>>, %arg6: memref<64x128xf32, #tpu.memory_space<vmem>>) attributes {dimension_semantics = [], scalar_prefetch = 0 : i64, scratch_operands = 1 : i64, tpu.core_type = #tpu.core_type<tc>} {
    %c0 = arith.constant 0 : index
    %c0_0 = arith.constant 0 : index
    %0 = vector.load %arg0[%c0, %c0_0] : memref<64x128xf32, #tpu.memory_space<vmem>>, vector<64x128xf32>
    %c0_1 = arith.constant 0 : index
    %c0_2 = arith.constant 0 : index
    %1 = vector.load %arg1[%c0_1, %c0_2] : memref<128x128xf32, #tpu.memory_space<vmem>>, vector<128x128xf32>
    %cst = arith.constant dense<0.000000e+00> : vector<64x128xf32>
    %2 = tpu.matmul %0, %1, %cst {dimension_numbers = #tpu.dot_dimension_numbers<[1], [0], [0], [1], [0, 0, 1, 1], [], []>} : vector<64x128xf32>, vector<128x128xf32>, vector<64x128xf32> -> vector<64x128xf32>
    %c0_3 = arith.constant 0 : index
    %c0_4 = arith.constant 0 : index
    %3 = vector.load %arg3[%c0_3, %c0_4] : memref<1x128xf32, #tpu.memory_space<vmem>>, vector<1x128xf32>
    %4 = vector.broadcast %3 : vector<1x128xf32> to vector<64x128xf32>
    %5 = arith.addf %2, %4 : vector<64x128xf32>
    %c0_5 = arith.constant 0 : index
    %c0_6 = arith.constant 0 : index
    %6 = vector.load %arg2[%c0_5, %c0_6] : memref<128x128xf32, #tpu.memory_space<vmem>>, vector<128x128xf32>
    %cst_7 = arith.constant 0.000000e+00 : f32
    %7 = vector.broadcast %cst_7 : f32 to vector<8x128xf32>
    %8 = vector.extract_strided_slice %5 {offsets = [0, 0], sizes = [8, 128], strides = [1, 1]} : vector<64x128xf32> to vector<8x128xf32>
    %cst_8 = arith.constant dense<0.000000e+00> : vector<8x128xf32>
    %9 = tpu.matmul %7, %6, %cst_8 {dimension_numbers = #tpu.dot_dimension_numbers<[1], [0], [0], [1], [0, 0, 1, 1], [], []>} : vector<8x128xf32>, vector<128x128xf32>, vector<8x128xf32> -> vector<8x128xf32>
    %10 = arith.addf %8, %9 : vector<8x128xf32>
    %11 = math.tanh %10 : vector<8x128xf32>
    %c0_9 = arith.constant 0 : index
    %c0_10 = arith.constant 0 : index
    %12 = vector.load %arg6[%c0_9, %c0_10] : memref<64x128xf32, #tpu.memory_space<vmem>>, vector<8x128xf32>
    tpu.vector_store %arg6[%c0_9, %c0_10], %11 {strides = array<i32>} : memref<64x128xf32, #tpu.memory_space<vmem>>, vector<8x128xf32>,
    %13 = vector.extract_strided_slice %5 {offsets = [8, 0], sizes = [8, 128], strides = [1, 1]} : vector<64x128xf32> to vector<8x128xf32>
    %cst_11 = arith.constant dense<0.000000e+00> : vector<8x128xf32>
    %14 = tpu.matmul %11, %6, %cst_11 {dimension_numbers = #tpu.dot_dimension_numbers<[1], [0], [0], [1], [0, 0, 1, 1], [], []>} : vector<8x128xf32>, vector<128x128xf32>, vector<8x128xf32> -> vector<8x128xf32>
    %15 = arith.addf %13, %14 : vector<8x128xf32>
    %16 = math.tanh %15 : vector<8x128xf32>
    %c8 = arith.constant 8 : index
    %c0_12 = arith.constant 0 : index
    %17 = vector.load %arg6[%c8, %c0_12] : memref<64x128xf32, #tpu.memory_space<vmem>>, vector<8x128xf32>
    tpu.vector_store %arg6[%c8, %c0_12], %16 {strides = array<i32>} : memref<64x128xf32, #tpu.memory_space<vmem>>, vector<8x128xf32>,
    %18 = vector.extract_strided_slice %5 {offsets = [16, 0], sizes = [8, 128], strides = [1, 1]} : vector<64x128xf32> to vector<8x128xf32>
    %cst_13 = arith.constant dense<0.000000e+00> : vector<8x128xf32>
    %19 = tpu.matmul %16, %6, %cst_13 {dimension_numbers = #tpu.dot_dimension_numbers<[1], [0], [0], [1], [0, 0, 1, 1], [], []>} : vector<8x128xf32>, vector<128x128xf32>, vector<8x128xf32> -> vector<8x128xf32>
    %20 = arith.addf %18, %19 : vector<8x128xf32>
    %21 = math.tanh %20 : vector<8x128xf32>
    %c16 = arith.constant 16 : index
    %c0_14 = arith.constant 0 : index
    %22 = vector.load %arg6[%c16, %c0_14] : memref<64x128xf32, #tpu.memory_space<vmem>>, vector<8x128xf32>
    tpu.vector_store %arg6[%c16, %c0_14], %21 {strides = array<i32>} : memref<64x128xf32, #tpu.memory_space<vmem>>, vector<8x128xf32>,
    %23 = vector.extract_strided_slice %5 {offsets = [24, 0], sizes = [8, 128], strides = [1, 1]} : vector<64x128xf32> to vector<8x128xf32>
    %cst_15 = arith.constant dense<0.000000e+00> : vector<8x128xf32>
    %24 = tpu.matmul %21, %6, %cst_15 {dimension_numbers = #tpu.dot_dimension_numbers<[1], [0], [0], [1], [0, 0, 1, 1], [], []>} : vector<8x128xf32>, vector<128x128xf32>, vector<8x128xf32> -> vector<8x128xf32>
    %25 = arith.addf %23, %24 : vector<8x128xf32>
    %26 = math.tanh %25 : vector<8x128xf32>
    %c24 = arith.constant 24 : index
    %c0_16 = arith.constant 0 : index
    %27 = vector.load %arg6[%c24, %c0_16] : memref<64x128xf32, #tpu.memory_space<vmem>>, vector<8x128xf32>
    tpu.vector_store %arg6[%c24, %c0_16], %26 {strides = array<i32>} : memref<64x128xf32, #tpu.memory_space<vmem>>, vector<8x128xf32>,
    %28 = vector.extract_strided_slice %5 {offsets = [32, 0], sizes = [8, 128], strides = [1, 1]} : vector<64x128xf32> to vector<8x128xf32>
    %cst_17 = arith.constant dense<0.000000e+00> : vector<8x128xf32>
    %29 = tpu.matmul %26, %6, %cst_17 {dimension_numbers = #tpu.dot_dimension_numbers<[1], [0], [0], [1], [0, 0, 1, 1], [], []>} : vector<8x128xf32>, vector<128x128xf32>, vector<8x128xf32> -> vector<8x128xf32>
    %30 = arith.addf %28, %29 : vector<8x128xf32>
    %31 = math.tanh %30 : vector<8x128xf32>
    %c32 = arith.constant 32 : index
    %c0_18 = arith.constant 0 : index
    %32 = vector.load %arg6[%c32, %c0_18] : memref<64x128xf32, #tpu.memory_space<vmem>>, vector<8x128xf32>
    tpu.vector_store %arg6[%c32, %c0_18], %31 {strides = array<i32>} : memref<64x128xf32, #tpu.memory_space<vmem>>, vector<8x128xf32>,
    %33 = vector.extract_strided_slice %5 {offsets = [40, 0], sizes = [8, 128], strides = [1, 1]} : vector<64x128xf32> to vector<8x128xf32>
    %cst_19 = arith.constant dense<0.000000e+00> : vector<8x128xf32>
    %34 = tpu.matmul %31, %6, %cst_19 {dimension_numbers = #tpu.dot_dimension_numbers<[1], [0], [0], [1], [0, 0, 1, 1], [], []>} : vector<8x128xf32>, vector<128x128xf32>, vector<8x128xf32> -> vector<8x128xf32>
    %35 = arith.addf %33, %34 : vector<8x128xf32>
    %36 = math.tanh %35 : vector<8x128xf32>
    %c40 = arith.constant 40 : index
    %c0_20 = arith.constant 0 : index
    %37 = vector.load %arg6[%c40, %c0_20] : memref<64x128xf32, #tpu.memory_space<vmem>>, vector<8x128xf32>
    tpu.vector_store %arg6[%c40, %c0_20], %36 {strides = array<i32>} : memref<64x128xf32, #tpu.memory_space<vmem>>, vector<8x128xf32>,
    %38 = vector.extract_strided_slice %5 {offsets = [48, 0], sizes = [8, 128], strides = [1, 1]} : vector<64x128xf32> to vector<8x128xf32>
    %cst_21 = arith.constant dense<0.000000e+00> : vector<8x128xf32>
    %39 = tpu.matmul %36, %6, %cst_21 {dimension_numbers = #tpu.dot_dimension_numbers<[1], [0], [0], [1], [0, 0, 1, 1], [], []>} : vector<8x128xf32>, vector<128x128xf32>, vector<8x128xf32> -> vector<8x128xf32>
    %40 = arith.addf %38, %39 : vector<8x128xf32>
    %41 = math.tanh %40 : vector<8x128xf32>
    %c48 = arith.constant 48 : index
    %c0_22 = arith.constant 0 : index
    %42 = vector.load %arg6[%c48, %c0_22] : memref<64x128xf32, #tpu.memory_space<vmem>>, vector<8x128xf32>
    tpu.vector_store %arg6[%c48, %c0_22], %41 {strides = array<i32>} : memref<64x128xf32, #tpu.memory_space<vmem>>, vector<8x128xf32>,
    %43 = vector.extract_strided_slice %5 {offsets = [56, 0], sizes = [8, 128], strides = [1, 1]} : vector<64x128xf32> to vector<8x128xf32>
    %cst_23 = arith.constant dense<0.000000e+00> : vector<8x128xf32>
    %44 = tpu.matmul %41, %6, %cst_23 {dimension_numbers = #tpu.dot_dimension_numbers<[1], [0], [0], [1], [0, 0, 1, 1], [], []>} : vector<8x128xf32>, vector<128x128xf32>, vector<8x128xf32> -> vector<8x128xf32>
    %45 = arith.addf %43, %44 : vector<8x128xf32>
    %46 = math.tanh %45 : vector<8x128xf32>
    %c56 = arith.constant 56 : index
    %c0_24 = arith.constant 0 : index
    %47 = vector.load %arg6[%c56, %c0_24] : memref<64x128xf32, #tpu.memory_space<vmem>>, vector<8x128xf32>
    tpu.vector_store %arg6[%c56, %c0_24], %46 {strides = array<i32>} : memref<64x128xf32, #tpu.memory_space<vmem>>, vector<8x128xf32>,
    %48 = tpu.iota {dimensions = array<i32: 0>} : vector<64x1xi32>
    %c8_i32 = arith.constant 8 : i32
    %c0_i32 = arith.constant 0 : i32
    %49 = arith.cmpi eq, %c8_i32, %c0_i32 : i32
    %c1_i32 = arith.constant 1 : i32
    %50 = arith.select %49, %c1_i32, %c8_i32 : i32
    %51 = vector.broadcast %50 : i32 to vector<64x1xi32>
    %52 = arith.remsi %48, %51 : vector<64x1xi32>
    %c0_i32_25 = arith.constant 0 : i32
    %53 = vector.broadcast %c0_i32_25 : i32 to vector<64x1xi32>
    %54 = arith.cmpi ne, %52, %53 : vector<64x1xi32>
    %c0_i32_26 = arith.constant 0 : i32
    %55 = vector.broadcast %c0_i32_26 : i32 to vector<64x1xi32>
    %56 = arith.cmpi slt, %52, %55 : vector<64x1xi32>
    %c0_i32_27 = arith.constant 0 : i32
    %57 = arith.cmpi slt, %50, %c0_i32_27 : i32
    %58 = vector.broadcast %57 : i1 to vector<64x1xi1>
    %59 = vector.broadcast %58 : vector<64x1xi1> to vector<64x1xi1>
    %60 = arith.xori %56, %59 : vector<64x1xi1>
    %61 = arith.andi %60, %54 : vector<64x1xi1>
    %62 = vector.broadcast %50 : i32 to vector<64x1xi32>
    %63 = arith.addi %52, %62 : vector<64x1xi32>
    %64 = arith.select %61, %63, %52 : vector<64x1xi1>, vector<64x1xi32>
    %c4_i32 = arith.constant 4 : i32
    %65 = vector.broadcast %c4_i32 : i32 to vector<64x1xi32>
    %66 = arith.cmpi slt, %64, %65 : vector<64x1xi32>
    %c0_28 = arith.constant 0 : index
    %c0_29 = arith.constant 0 : index
    %67 = vector.load %arg6[%c0_28, %c0_29] : memref<64x128xf32, #tpu.memory_space<vmem>>, vector<64x128xf32>
    %cst_30 = arith.constant 0.000000e+00 : f32
    %68 = vector.shape_cast %66 : vector<64x1xi1> to vector<64x1xi1>
    %69 = vector.broadcast %68 : vector<64x1xi1> to vector<64x128xi1>
    %70 = vector.broadcast %cst_30 : f32 to vector<64x128xf32>
    %71 = arith.select %69, %67, %70 : vector<64x128xi1>, vector<64x128xf32>
    %cst_31 = arith.constant 0.000000e+00 : f32
    %72 = vector.broadcast %cst_31 : f32 to vector<64x256xf32>
    %c1_i32_32 = arith.constant 1 : i32
    %73 = tpu.dynamic_rotate %71 by %c1_i32_32 dim 0 : vector<64x128xf32>, i32 -> vector<64x128xf32>
    %c0_33 = arith.constant 0 : index
    %c0_34 = arith.constant 0 : index
    %c0_35 = arith.constant 0 : index
    %74 = vector.load %arg4[%c0_33, %c0_34, %c0_35] : memref<3x128x256xf32, #tpu.memory_space<vmem>>, vector<1x128x256xf32>
    %75 = vector.shape_cast %74 : vector<1x128x256xf32> to vector<128x256xf32>
    %cst_36 = arith.constant dense<0.000000e+00> : vector<64x256xf32>
    %76 = tpu.matmul %73, %75, %cst_36 {dimension_numbers = #tpu.dot_dimension_numbers<[1], [0], [0], [1], [0, 0, 1, 1], [], []>} : vector<64x128xf32>, vector<128x256xf32>, vector<64x256xf32> -> vector<64x256xf32>
    %77 = arith.addf %72, %76 : vector<64x256xf32>
    %c1 = arith.constant 1 : index
    %c0_37 = arith.constant 0 : index
    %c0_38 = arith.constant 0 : index
    %78 = vector.load %arg4[%c1, %c0_37, %c0_38] : memref<3x128x256xf32, #tpu.memory_space<vmem>>, vector<1x128x256xf32>
    %79 = vector.shape_cast %78 : vector<1x128x256xf32> to vector<128x256xf32>
    %cst_39 = arith.constant dense<0.000000e+00> : vector<64x256xf32>
    %80 = tpu.matmul %71, %79, %cst_39 {dimension_numbers = #tpu.dot_dimension_numbers<[1], [0], [0], [1], [0, 0, 1, 1], [], []>} : vector<64x128xf32>, vector<128x256xf32>, vector<64x256xf32> -> vector<64x256xf32>
    %81 = arith.addf %77, %80 : vector<64x256xf32>
    %c63_i32 = arith.constant 63 : i32
    %82 = tpu.dynamic_rotate %71 by %c63_i32 dim 0 : vector<64x128xf32>, i32 -> vector<64x128xf32>
    %c2 = arith.constant 2 : index
    %c0_40 = arith.constant 0 : index
    %c0_41 = arith.constant 0 : index
    %83 = vector.load %arg4[%c2, %c0_40, %c0_41] : memref<3x128x256xf32, #tpu.memory_space<vmem>>, vector<1x128x256xf32>
    %84 = vector.shape_cast %83 : vector<1x128x256xf32> to vector<128x256xf32>
    %cst_42 = arith.constant dense<0.000000e+00> : vector<64x256xf32>
    %85 = tpu.matmul %82, %84, %cst_42 {dimension_numbers = #tpu.dot_dimension_numbers<[1], [0], [0], [1], [0, 0, 1, 1], [], []>} : vector<64x128xf32>, vector<128x256xf32>, vector<64x256xf32> -> vector<64x256xf32>
    %86 = arith.addf %81, %85 : vector<64x256xf32>
    %87 = vector.extract_strided_slice %86 {offsets = [0, 0], sizes = [64, 128], strides = [1, 1]} : vector<64x256xf32> to vector<64x128xf32>
    %88 = vector.extract_strided_slice %86 {offsets = [0, 128], sizes = [64, 128], strides = [1, 1]} : vector<64x256xf32> to vector<64x128xf32>
    %89 = arith.negf %88 : vector<64x128xf32>
    %90 = math.exp %89 : vector<64x128xf32>
    %cst_43 = arith.constant 1.000000e+00 : f32
    %91 = vector.broadcast %cst_43 : f32 to vector<64x128xf32>
    %92 = arith.addf %91, %90 : vector<64x128xf32>
    %93 = arith.divf %91, %92 : vector<64x128xf32>
    %94 = arith.mulf %87, %93 : vector<64x128xf32>
    %c0_44 = arith.constant 0 : index
    %c0_45 = arith.constant 0 : index
    %95 = vector.load %arg5[%c0_44, %c0_45] : memref<64x128xf32, #tpu.memory_space<vmem>>, vector<64x128xf32>
    tpu.vector_store %arg5[%c0_44, %c0_45], %94 {strides = array<i32>} : memref<64x128xf32, #tpu.memory_space<vmem>>, vector<64x128xf32>,
    return
  }
}

</mosaic_0001>

<llo_original>
// kernel: tpu_custom_call.1
$region0: #{tpu_custom_call.1}
  #allocation0 [shape = 'u32[]', space=smem, size = 0x4, offset = 0x4, fixed_abs, tag = 'smem constant byte address 0x4 - core index']
  #allocation1 [shape = 'u32[144,128]{1,0:T(1,128)}', space=vmem, size = 0x12000, scoped, tag = 'internal scratch']
  #allocation2 [shape = 'f32[64,128]{1,0:T(8,128)}', space=vmem, size = 0x8000, scoped, tag = 'scratch operand']
  %s0 = inlined_call_operand.hbm [shape: f32[64,128], index: 0, kind: input, shape index: {}]
  %s1 = inlined_call_operand.hbm [shape: f32[128,128], index: 1, kind: input, shape index: {}]
  %s2 = inlined_call_operand.hbm [shape: f32[128,128], index: 2, kind: input, shape index: {}]
  %s3 = inlined_call_operand.vmem [shape: f32[1,128], index: 3, kind: input, shape index: {}]
  %s4 = inlined_call_operand.hbm [shape: f32[3,128,256], index: 4, kind: input, shape index: {}]
  %s5 = inlined_call_operand.hbm [shape: f32[64,128], index: 5, kind: output, shape index: {}]
  %s6 = sld [smem:[#allocation0]]
  $region46: #{tpu_custom_call.1} parent=0
    _
  %s8 = ssub.s32 1, %s6
  %s9 = scalar_select 0, %s8, %s6
  $region1: #{tpu_custom_call.1} parent=0
    #allocation3 [shape = 'u8[32768]{0}', space=vmem, size = 0x8000, scoped, tag = 'input window, operand 0, single buffered']
    #allocation4 [shape = 's32[1]{0}', space=sflag, size = 0x4, scoped, tag = 'scoped memory for tpu_custom_call.1']
    #allocation5 [shape = 's32[1]{0}', space=sflag, size = 0x4, scoped, tag = 'scoped memory for tpu_custom_call.1']
    #allocation6 [shape = 'u8[65536]{0}', space=vmem, size = 0x10000, scoped, tag = 'input window, operand 1, single buffered']
    #allocation7 [shape = 's32[1]{0}', space=sflag, size = 0x4, scoped, tag = 'scoped memory for tpu_custom_call.1']
    #allocation8 [shape = 'u8[65536]{0}', space=vmem, size = 0x10000, scoped, tag = 'input window, operand 2, single buffered']
    #allocation9 [shape = 'u8[393216]{0}', space=vmem, size = 0x60000, scoped, tag = 'input window, operand 4, single buffered']
    #allocation10 [shape = 's32[1]{0}', space=sflag, size = 0x4, scoped, tag = 'scoped memory for tpu_custom_call.1']
    #allocation11 [shape = 'u8[32768]{0}', space=vmem, size = 0x8000, scoped, tag = 'output window, operand 0, single buffered']
    %10 = vsyncpa [#allocation4], 0
    %11 = vsyncpa [#allocation7], 0
    %12 = vsyncpa [#allocation10], 0
    %13 = vsyncpa [#allocation5], 0
    // Predicated region
    $region2: #{tpu_custom_call.1} parent=1 // pred_check
      _
    $region3: #{tpu_custom_call.1} parent=1 // pred_check_branch
      %15 = sbr.rel (0) target = $region5
    $region4: #{tpu_custom_call.1} parent=1 // pred_region
      %s17 = ssub.s32 1024, 1024
      %18 = vsyncadd [#allocation4], %s17
      %s19 = sshll.u32 [#allocation3], 4
      %s20 = int_to_ptr.vmem [resolvable:$true] %s19
      %25 = dma.hbm_to_vmem [thread:$0]  %s0, 1024, %s20, [#allocation4], 128, 128, 8
    $region5: #{tpu_custom_call.1} parent=1 // pred_fallthru
      _
    // Predicated region
    $region6: #{tpu_custom_call.1} parent=1 // pred_check
      _
    $region7: #{tpu_custom_call.1} parent=1 // pred_check_branch
      %27 = sbr.rel (0) target = $region9
    $region8: #{tpu_custom_call.1} parent=1 // pred_region
      %s29 = ssub.s32 2048, 2048
      %30 = vsyncadd [#allocation7], %s29
      %s31 = sshll.u32 [#allocation6], 4
      %s32 = int_to_ptr.vmem [resolvable:$true] %s31
      %37 = dma.hbm_to_vmem [thread:$0]  %s1, 2048, %s32, [#allocation7], 128, 128, 8
    $region9: #{tpu_custom_call.1} parent=1 // pred_fallthru
      _
    // Predicated region
    $region10: #{tpu_custom_call.1} parent=1 // pred_check
      _
    $region11: #{tpu_custom_call.1} parent=1 // pred_check_branch
      %39 = sbr.rel (0) target = $region13
    $region12: #{tpu_custom_call.1} parent=1 // pred_region
      %s41 = ssub.s32 2048, 2048
      %42 = vsyncadd [#allocation7], %s41
      %s43 = sshll.u32 [#allocation8], 4
      %s44 = int_to_ptr.vmem [resolvable:$true] %s43
      %49 = dma.hbm_to_vmem [thread:$0]  %s2, 2048, %s44, [#allocation7], 128, 128, 8
    $region13: #{tpu_custom_call.1} parent=1 // pred_fallthru
      _
    // Predicated region
    $region14: #{tpu_custom_call.1} parent=1 // pred_check
      _
    $region15: #{tpu_custom_call.1} parent=1 // pred_check_branch
      %51 = sbr.rel (0) target = $region17
    $region16: #{tpu_custom_call.1} parent=1 // pred_region
      _
    $region17: #{tpu_custom_call.1} parent=1 // pred_fallthru
      _
    // Predicated region
    $region18: #{tpu_custom_call.1} parent=1 // pred_check
      _
    $region19: #{tpu_custom_call.1} parent=1 // pred_check_branch
      %53 = sbr.rel (0) target = $region21
    $region20: #{tpu_custom_call.1} parent=1 // pred_region
      %s55 = ssub.s32 12288, 12288
      %56 = vsyncadd [#allocation10], %s55
      %s57 = sshll.u32 [#allocation9], 4
      %s58 = int_to_ptr.vmem [resolvable:$true] %s57
      %63 = dma.hbm_to_vmem [thread:$0]  %s4, 12288, %s58, [#allocation10], 256, 256, 16
    $region21: #{tpu_custom_call.1} parent=1 // pred_fallthru
      _
    // Predicated region
    $region22: #{tpu_custom_call.1} parent=1 // pred_check
      _
    $region23: #{tpu_custom_call.1} parent=1 // pred_check_branch
      %65 = sbr.rel (0) target = $region25
    $region24: #{tpu_custom_call.1} parent=1 // pred_region
      %66 = dma.done [#allocation4], 1024
    $region25: #{tpu_custom_call.1} parent=1 // pred_fallthru
      _
    // Predicated region
    $region26: #{tpu_custom_call.1} parent=1 // pred_check
      _
    $region27: #{tpu_custom_call.1} parent=1 // pred_check_branch
      %68 = sbr.rel (0) target = $region29
    $region28: #{tpu_custom_call.1} parent=1 // pred_region
      %69 = dma.done [#allocation7], 2048
    $region29: #{tpu_custom_call.1} parent=1 // pred_fallthru
      _
    // Predicated region
    $region30: #{tpu_custom_call.1} parent=1 // pred_check
      _
    $region31: #{tpu_custom_call.1} parent=1 // pred_check_branch
      %71 = sbr.rel (0) target = $region33
    $region32: #{tpu_custom_call.1} parent=1 // pred_region
      %72 = dma.done [#allocation7], 2048
    $region33: #{tpu_custom_call.1} parent=1 // pred_fallthru
      _
    // Predicated region
    $region34: #{tpu_custom_call.1} parent=1 // pred_check
      _
    $region35: #{tpu_custom_call.1} parent=1 // pred_check_branch
      %74 = sbr.rel (0) target = $region37
    $region36: #{tpu_custom_call.1} parent=1 // pred_region
      %75 = dma.done [#allocation10], 12288
    $region37: #{tpu_custom_call.1} parent=1 // pred_fallthru
      _
    %v76 = vld [vmem:[#allocation3] sm:$0xff]
    %v77 = vld [vmem:[#allocation3 + $0x8] sm:$0xff]
    %v78 = vld [vmem:[#allocation3 + $0x10] sm:$0xff]
    %v79 = vld [vmem:[#allocation3 + $0x18] sm:$0xff]
    %v80 = vld [vmem:[#allocation3 + $0x20] sm:$0xff]
    %v81 = vld [vmem:[#allocation3 + $0x28] sm:$0xff]
    %v82 = vld [vmem:[#allocation3 + $0x30] sm:$0xff]
    %v83 = vld [vmem:[#allocation3 + $0x38] sm:$0xff]
    %v84 = vld [vmem:[#allocation6] sm:$0xff]
    %v85 = vld [vmem:[#allocation6 + $0x8] sm:$0xff]
    %v86 = vld [vmem:[#allocation6 + $0x10] sm:$0xff]
    %v87 = vld [vmem:[#allocation6 + $0x18] sm:$0xff]
    %v88 = vld [vmem:[#allocation6 + $0x20] sm:$0xff]
    %v89 = vld [vmem:[#allocation6 + $0x28] sm:$0xff]
    %v90 = vld [vmem:[#allocation6 + $0x30] sm:$0xff]
    %v91 = vld [vmem:[#allocation6 + $0x38] sm:$0xff]
    %v92 = vld [vmem:[#allocation6 + $0x40] sm:$0xff]
    %v93 = vld [vmem:[#allocation6 + $0x48] sm:$0xff]
    %v94 = vld [vmem:[#allocation6 + $0x50] sm:$0xff]
    %v95 = vld [vmem:[#allocation6 + $0x58] sm:$0xff]
    %v96 = vld [vmem:[#allocation6 + $0x60] sm:$0xff]
    %v97 = vld [vmem:[#allocation6 + $0x68] sm:$0xff]
    %v98 = vld [vmem:[#allocation6 + $0x70] sm:$0xff]
    %v99 = vld [vmem:[#allocation6 + $0x78] sm:$0xff]
    %v100 = vld [vmem:[%s3] sm:$0x1]
    %v102 = vlaneseq
    %v103 = vshrl.u32 %v102, 7
    %v104 = vsub.s32 0, %v103
    %v105 = vrot.slane %v100, %v104
    %107 = vmatprep.subr.mxu0 0.0
    %108 = vmatpush1.msra.mxu0 %v99
    %109 = vmatprep.subr.mxu0 0.0
    %110 = vmatpush1.msra.mxu0 %v98
    %111 = vmatprep.subr.mxu0 0.0
    %112 = vmatpush1.msra.mxu0 %v97
    %113 = vmatprep.subr.mxu0 0.0
    %114 = vmatpush1.msra.mxu0 %v96
    %115 = vmatprep.subr.mxu0 0.0
    %116 = vmatpush1.msra.mxu0 %v95
    %117 = vmatprep.subr.mxu0 0.0
    %118 = vmatpush1.msra.mxu0 %v94
    %119 = vmatprep.subr.mxu0 0.0
    %120 = vmatpush1.msra.mxu0 %v93
    %121 = vmatprep.subr.mxu0 0.0
    %122 = vmatpush1.msra.mxu0 %v92
    %123 = vmatprep.subr.mxu0 0.0
    %124 = vmatpush1.msra.mxu0 %v91
    %125 = vmatprep.subr.mxu0 0.0
    %126 = vmatpush1.msra.mxu0 %v90
    %127 = vmatprep.subr.mxu0 0.0
    %128 = vmatpush1.msra.mxu0 %v89
    %129 = vmatprep.subr.mxu0 0.0
    %130 = vmatpush1.msra.mxu0 %v88
    %131 = vmatprep.subr.mxu0 0.0
    %132 = vmatpush1.msra.mxu0 %v87
    %133 = vmatprep.subr.mxu0 0.0
    %134 = vmatpush1.msra.mxu0 %v86
    %135 = vmatprep.subr.mxu0 0.0
    %136 = vmatpush1.msra.mxu0 %v85
    %137 = vmatprep.subr.mxu0 0.0
    %138 = vmatpush1.msra.mxu0 %v84
    %139 = vmatprep.subr.mxu0 0.0
    %140 = vmatpush2.msra.mxu0 0.0
    %141 = vmatprep.subr.mxu0 0.0
    %142 = vmatpush2.msra.mxu0 0.0
    %143 = vmatprep.subr.mxu0 0.0
    %144 = vmatpush2.msra.mxu0 0.0
    %145 = vmatprep.subr.mxu0 0.0
    %146 = vmatpush2.msra.mxu0 0.0
    %147 = vmatprep.subr.mxu0 0.0
    %148 = vmatpush2.msra.mxu0 0.0
    %149 = vmatprep.subr.mxu0 0.0
    %150 = vmatpush2.msra.mxu0 0.0
    %151 = vmatprep.subr.mxu0 0.0
    %152 = vmatpush2.msra.mxu0 0.0
    %153 = vmatprep.subr.mxu0 0.0
    %154 = vmatpush2.msra.mxu0 0.0
    %155 = vmatprep.subr.mxu0 0.0
    %156 = vmatpush2.msra.mxu0 0.0
    %157 = vmatprep.subr.mxu0 0.0
    %158 = vmatpush2.msra.mxu0 0.0
    %159 = vmatprep.subr.mxu0 0.0
    %160 = vmatpush2.msra.mxu0 0.0
    %161 = vmatprep.subr.mxu0 0.0
    %162 = vmatpush2.msra.mxu0 0.0
    %163 = vmatprep.subr.mxu0 0.0
    %164 = vmatpush2.msra.mxu0 0.0
    %165 = vmatprep.subr.mxu0 0.0
    %166 = vmatpush2.msra.mxu0 0.0
    %167 = vmatprep.subr.mxu0 0.0
    %168 = vmatpush2.msra.mxu0 0.0
    %169 = vmatprep.subr.mxu0 0.0
    %170 = vmatpush2.msra.mxu0 0.0
    %171 = vmatprep.mubr.f32.mxu0 0.0
    %172 = vmatmul.mubr.f32.gmra.mxu0 %v76
    %v173 = vpop.f32.mrf.mxu0
    %v174 = vadd.f32 %v105, %v173
    %v175 = vpop.f32.mrf.mxu0
    %176 = vmatprep.mubr.f32.mxu0 0.0
    %177 = vmatmul.mubr.f32.gmra.mxu0 %v77
    %v178 = vpop.f32.mrf.mxu0
    %v179 = vadd.f32 %v105, %v178
    %v180 = vpop.f32.mrf.mxu0
    %181 = vmatprep.mubr.f32.mxu0 0.0
    %182 = vmatmul.mubr.f32.gmra.mxu0 %v78
    %v183 = vpop.f32.mrf.mxu0
    %v184 = vadd.f32 %v105, %v183
    %v185 = vpop.f32.mrf.mxu0
    %186 = vmatprep.mubr.f32.mxu0 0.0
    %187 = vmatmul.mubr.f32.gmra.mxu0 %v79
    %v188 = vpop.f32.mrf.mxu0
    %v189 = vadd.f32 %v105, %v188
    %v190 = vpop.f32.mrf.mxu0
    %191 = vmatprep.mubr.f32.mxu0 0.0
    %192 = vmatmul.mubr.f32.gmra.mxu0 %v80
    %v193 = vpop.f32.mrf.mxu0
    %v194 = vadd.f32 %v105, %v193
    %v195 = vpop.f32.mrf.mxu0
    %196 = vmatprep.mubr.f32.mxu0 0.0
    %197 = vmatmul.mubr.f32.gmra.mxu0 %v81
    %v198 = vpop.f32.mrf.mxu0
    %v199 = vadd.f32 %v105, %v198
    %v200 = vpop.f32.mrf.mxu0
    %201 = vmatprep.mubr.f32.mxu0 0.0
    %202 = vmatmul.mubr.f32.gmra.mxu0 %v82
    %v203 = vpop.f32.mrf.mxu0
    %v204 = vadd.f32 %v105, %v203
    %v205 = vpop.f32.mrf.mxu0
    %206 = vmatprep.mubr.f32.mxu0 0.0
    %207 = vmatmul.mubr.f32.gmra.mxu0 %v83
    %v208 = vpop.f32.mrf.mxu0
    %v209 = vadd.f32 %v105, %v208
    %v210 = vpop.f32.mrf.mxu0
    %211 = vdwg.mxu0
    %v212 = vld [vmem:[#allocation8] sm:$0xff]
    %v213 = vld [vmem:[#allocation8 + $0x8] sm:$0xff]
    %v214 = vld [vmem:[#allocation8 + $0x10] sm:$0xff]
    %v215 = vld [vmem:[#allocation8 + $0x18] sm:$0xff]
    %v216 = vld [vmem:[#allocation8 + $0x20] sm:$0xff]
    %v217 = vld [vmem:[#allocation8 + $0x28] sm:$0xff]
    %v218 = vld [vmem:[#allocation8 + $0x30] sm:$0xff]
    %v219 = vld [vmem:[#allocation8 + $0x38] sm:$0xff]
    %v220 = vld [vmem:[#allocation8 + $0x40] sm:$0xff]
    %v221 = vld [vmem:[#allocation8 + $0x48] sm:$0xff]
    %v222 = vld [vmem:[#allocation8 + $0x50] sm:$0xff]
    %v223 = vld [vmem:[#allocation8 + $0x58] sm:$0xff]
    %v224 = vld [vmem:[#allocation8 + $0x60] sm:$0xff]
    %v225 = vld [vmem:[#allocation8 + $0x68] sm:$0xff]
    %v226 = vld [vmem:[#allocation8 + $0x70] sm:$0xff]
    %v227 = vld [vmem:[#allocation8 + $0x78] sm:$0xff]
    %228 = vmatprep.subr.mxu0 0.0
    %229 = vmatpush1.msra.mxu0 %v227
    %230 = vmatprep.subr.mxu0 0.0
    %231 = vmatpush1.msra.mxu0 %v226
    %232 = vmatprep.subr.mxu0 0.0
    %233 = vmatpush1.msra.mxu0 %v225
    %234 = vmatprep.subr.mxu0 0.0
    %235 = vmatpush1.msra.mxu0 %v224
    %236 = vmatprep.subr.mxu0 0.0
    %237 = vmatpush1.msra.mxu0 %v223
    %238 = vmatprep.subr.mxu0 0.0
    %239 = vmatpush1.msra.mxu0 %v222
    %240 = vmatprep.subr.mxu0 0.0
    %241 = vmatpush1.msra.mxu0 %v221
    %242 = vmatprep.subr.mxu0 0.0
    %243 = vmatpush1.msra.mxu0 %v220
    %244 = vmatprep.subr.mxu0 0.0
    %245 = vmatpush1.msra.mxu0 %v219
    %246 = vmatprep.subr.mxu0 0.0
    %247 = vmatpush1.msra.mxu0 %v218
    %248 = vmatprep.subr.mxu0 0.0
    %249 = vmatpush1.msra.mxu0 %v217
    %250 = vmatprep.subr.mxu0 0.0
    %251 = vmatpush1.msra.mxu0 %v216
    %252 = vmatprep.subr.mxu0 0.0
    %253 = vmatpush1.msra.mxu0 %v215
    %254 = vmatprep.subr.mxu0 0.0
    %255 = vmatpush1.msra.mxu0 %v214
    %256 = vmatprep.subr.mxu0 0.0
    %257 = vmatpush1.msra.mxu0 %v213
    %258 = vmatprep.subr.mxu0 0.0
    %259 = vmatpush1.msra.mxu0 %v212
    %260 = vmatprep.subr.mxu0 0.0
    %261 = vmatpush2.msra.mxu0 0.0
    %262 = vmatprep.subr.mxu0 0.0
    %263 = vmatpush2.msra.mxu0 0.0
    %264 = vmatprep.subr.mxu0 0.0
    %265 = vmatpush2.msra.mxu0 0.0
    %266 = vmatprep.subr.mxu0 0.0
    %267 = vmatpush2.msra.mxu0 0.0
    %268 = vmatprep.subr.mxu0 0.0
    %269 = vmatpush2.msra.mxu0 0.0
    %270 = vmatprep.subr.mxu0 0.0
    %271 = vmatpush2.msra.mxu0 0.0
    %272 = vmatprep.subr.mxu0 0.0
    %273 = vmatpush2.msra.mxu0 0.0
    %274 = vmatprep.subr.mxu0 0.0
    %275 = vmatpush2.msra.mxu0 0.0
    %276 = vmatprep.subr.mxu0 0.0
    %277 = vmatpush2.msra.mxu0 0.0
    %278 = vmatprep.subr.mxu0 0.0
    %279 = vmatpush2.msra.mxu0 0.0
    %280 = vmatprep.subr.mxu0 0.0
    %281 = vmatpush2.msra.mxu0 0.0
    %282 = vmatprep.subr.mxu0 0.0
    %283 = vmatpush2.msra.mxu0 0.0
    %284 = vmatprep.subr.mxu0 0.0
    %285 = vmatpush2.msra.mxu0 0.0
    %286 = vmatprep.subr.mxu0 0.0
    %287 = vmatpush2.msra.mxu0 0.0
    %288 = vmatprep.subr.mxu0 0.0
    %289 = vmatpush2.msra.mxu0 0.0
    %290 = vmatprep.subr.mxu0 0.0
    %291 = vmatpush2.msra.mxu0 0.0
    %292 = vmatprep.mubr.f32.mxu0 0.0
    %293 = vmatmul.mubr.f32.gmra.mxu0 0.0
    %v294 = vpop.f32.mrf.mxu0
    %v295 = vadd.f32 0.0, %v294
    %v296 = vpop.f32.mrf.mxu0
    %297 = vdwg.mxu0
    %v298 = vadd.f32 %v174, %v295
    %v299 = vtanh.pop %v298
    %300 = vst [vmem:[#allocation2] sm:$0xff] %v299
    %301 = vmatprep.subr.mxu0 0.0
    %302 = vmatpush1.msra.mxu0 %v227
    %303 = vmatprep.subr.mxu0 0.0
    %304 = vmatpush1.msra.mxu0 %v226
    %305 = vmatprep.subr.mxu0 0.0
    %306 = vmatpush1.msra.mxu0 %v225
    %307 = vmatprep.subr.mxu0 0.0
    %308 = vmatpush1.msra.mxu0 %v224
    %309 = vmatprep.subr.mxu0 0.0
    %310 = vmatpush1.msra.mxu0 %v223
    %311 = vmatprep.subr.mxu0 0.0
    %312 = vmatpush1.msra.mxu0 %v222
    %313 = vmatprep.subr.mxu0 0.0
    %314 = vmatpush1.msra.mxu0 %v221
    %315 = vmatprep.subr.mxu0 0.0
    %316 = vmatpush1.msra.mxu0 %v220
    %317 = vmatprep.subr.mxu0 0.0
    %318 = vmatpush1.msra.mxu0 %v219
    %319 = vmatprep.subr.mxu0 0.0
    %320 = vmatpush1.msra.mxu0 %v218
    %321 = vmatprep.subr.mxu0 0.0
    %322 = vmatpush1.msra.mxu0 %v217
    %323 = vmatprep.subr.mxu0 0.0
    %324 = vmatpush1.msra.mxu0 %v216
    %325 = vmatprep.subr.mxu0 0.0
    %326 = vmatpush1.msra.mxu0 %v215
    %327 = vmatprep.subr.mxu0 0.0
    %328 = vmatpush1.msra.mxu0 %v214
    %329 = vmatprep.subr.mxu0 0.0
    %330 = vmatpush1.msra.mxu0 %v213
    %331 = vmatprep.subr.mxu0 0.0
    %332 = vmatpush1.msra.mxu0 %v212
    %333 = vmatprep.subr.mxu0 0.0
    %334 = vmatpush2.msra.mxu0 0.0
    %335 = vmatprep.subr.mxu0 0.0
    %336 = vmatpush2.msra.mxu0 0.0
    %337 = vmatprep.subr.mxu0 0.0
    %338 = vmatpush2.msra.mxu0 0.0
    %339 = vmatprep.subr.mxu0 0.0
    %340 = vmatpush2.msra.mxu0 0.0
    %341 = vmatprep.subr.mxu0 0.0
    %342 = vmatpush2.msra.mxu0 0.0
    %343 = vmatprep.subr.mxu0 0.0
    %344 = vmatpush2.msra.mxu0 0.0
    %345 = vmatprep.subr.mxu0 0.0
    %346 = vmatpush2.msra.mxu0 0.0
    %347 = vmatprep.subr.mxu0 0.0
    %348 = vmatpush2.msra.mxu0 0.0
    %349 = vmatprep.subr.mxu0 0.0
    %350 = vmatpush2.msra.mxu0 0.0
    %351 = vmatprep.subr.mxu0 0.0
    %352 = vmatpush2.msra.mxu0 0.0
    %353 = vmatprep.subr.mxu0 0.0
    %354 = vmatpush2.msra.mxu0 0.0
    %355 = vmatprep.subr.mxu0 0.0
    %356 = vmatpush2.msra.mxu0 0.0
    %357 = vmatprep.subr.mxu0 0.0
    %358 = vmatpush2.msra.mxu0 0.0
    %359 = vmatprep.subr.mxu0 0.0
    %360 = vmatpush2.msra.mxu0 0.0
    %361 = vmatprep.subr.mxu0 0.0
    %362 = vmatpush2.msra.mxu0 0.0
    %363 = vmatprep.subr.mxu0 0.0
    %364 = vmatpush2.msra.mxu0 0.0
    %365 = vmatprep.mubr.f32.mxu0 0.0
    %366 = vmatmul.mubr.f32.gmra.mxu0 %v299
    %v367 = vpop.f32.mrf.mxu0
    %v368 = vadd.f32 0.0, %v367
    %v369 = vpop.f32.mrf.mxu0
    %370 = vdwg.mxu0
    %v371 = vadd.f32 %v179, %v368
    %v372 = vtanh.pop %v371
    %373 = vst [vmem:[#allocation2 + $0x8] sm:$0xff] %v372
    %374 = vmatprep.subr.mxu0 0.0
    %375 = vmatpush1.msra.mxu0 %v227
    %376 = vmatprep.subr.mxu0 0.0
    %377 = vmatpush1.msra.mxu0 %v226
    %378 = vmatprep.subr.mxu0 0.0
    %379 = vmatpush1.msra.mxu0 %v225
    %380 = vmatprep.subr.mxu0 0.0
    %381 = vmatpush1.msra.mxu0 %v224
    %382 = vmatprep.subr.mxu0 0.0
    %383 = vmatpush1.msra.mxu0 %v223
    %384 = vmatprep.subr.mxu0 0.0
    %385 = vmatpush1.msra.mxu0 %v222
    %386 = vmatprep.subr.mxu0 0.0
    %387 = vmatpush1.msra.mxu0 %v221
    %388 = vmatprep.subr.mxu0 0.0
    %389 = vmatpush1.msra.mxu0 %v220
    %390 = vmatprep.subr.mxu0 0.0
    %391 = vmatpush1.msra.mxu0 %v219
    %392 = vmatprep.subr.mxu0 0.0
    %393 = vmatpush1.msra.mxu0 %v218
    %394 = vmatprep.subr.mxu0 0.0
    %395 = vmatpush1.msra.mxu0 %v217
    %396 = vmatprep.subr.mxu0 0.0
    %397 = vmatpush1.msra.mxu0 %v216
    %398 = vmatprep.subr.mxu0 0.0
    %399 = vmatpush1.msra.mxu0 %v215
    %400 = vmatprep.subr.mxu0 0.0
    %401 = vmatpush1.msra.mxu0 %v214
    %402 = vmatprep.subr.mxu0 0.0
    %403 = vmatpush1.msra.mxu0 %v213
    %404 = vmatprep.subr.mxu0 0.0
    %405 = vmatpush1.msra.mxu0 %v212
    %406 = vmatprep.subr.mxu0 0.0
    %407 = vmatpush2.msra.mxu0 0.0
    %408 = vmatprep.subr.mxu0 0.0
    %409 = vmatpush2.msra.mxu0 0.0
    %410 = vmatprep.subr.mxu0 0.0
    %411 = vmatpush2.msra.mxu0 0.0
    %412 = vmatprep.subr.mxu0 0.0
    %413 = vmatpush2.msra.mxu0 0.0
    %414 = vmatprep.subr.mxu0 0.0
    %415 = vmatpush2.msra.mxu0 0.0
    %416 = vmatprep.subr.mxu0 0.0
    %417 = vmatpush2.msra.mxu0 0.0
    %418 = vmatprep.subr.mxu0 0.0
    %419 = vmatpush2.msra.mxu0 0.0
    %420 = vmatprep.subr.mxu0 0.0
    %421 = vmatpush2.msra.mxu0 0.0
    %422 = vmatprep.subr.mxu0 0.0
    %423 = vmatpush2.msra.mxu0 0.0
    %424 = vmatprep.subr.mxu0 0.0
    %425 = vmatpush2.msra.mxu0 0.0
    %426 = vmatprep.subr.mxu0 0.0
    %427 = vmatpush2.msra.mxu0 0.0
    %428 = vmatprep.subr.mxu0 0.0
    %429 = vmatpush2.msra.mxu0 0.0
    %430 = vmatprep.subr.mxu0 0.0
    %431 = vmatpush2.msra.mxu0 0.0
    %432 = vmatprep.subr.mxu0 0.0
    %433 = vmatpush2.msra.mxu0 0.0
    %434 = vmatprep.subr.mxu0 0.0
    %435 = vmatpush2.msra.mxu0 0.0
    %436 = vmatprep.subr.mxu0 0.0
    %437 = vmatpush2.msra.mxu0 0.0
    %438 = vmatprep.mubr.f32.mxu0 0.0
    %439 = vmatmul.mubr.f32.gmra.mxu0 %v372
    %v440 = vpop.f32.mrf.mxu0
    %v441 = vadd.f32 0.0, %v440
    %v442 = vpop.f32.mrf.mxu0
    %443 = vdwg.mxu0
    %v444 = vadd.f32 %v184, %v441
    %v445 = vtanh.pop %v444
    %446 = vst [vmem:[#allocation2 + $0x10] sm:$0xff] %v445
    %447 = vmatprep.subr.mxu0 0.0
    %448 = vmatpush1.msra.mxu0 %v227
    %449 = vmatprep.subr.mxu0 0.0
    %450 = vmatpush1.msra.mxu0 %v226
    %451 = vmatprep.subr.mxu0 0.0
    %452 = vmatpush1.msra.mxu0 %v225
    %453 = vmatprep.subr.mxu0 0.0
    %454 = vmatpush1.msra.mxu0 %v224
    %455 = vmatprep.subr.mxu0 0.0
    %456 = vmatpush1.msra.mxu0 %v223
    %457 = vmatprep.subr.mxu0 0.0
    %458 = vmatpush1.msra.mxu0 %v222
    %459 = vmatprep.subr.mxu0 0.0
    %460 = vmatpush1.msra.mxu0 %v221
    %461 = vmatprep.subr.mxu0 0.0
    %462 = vmatpush1.msra.mxu0 %v220
    %463 = vmatprep.subr.mxu0 0.0
    %464 = vmatpush1.msra.mxu0 %v219
    %465 = vmatprep.subr.mxu0 0.0
    %466 = vmatpush1.msra.mxu0 %v218
    %467 = vmatprep.subr.mxu0 0.0
    %468 = vmatpush1.msra.mxu0 %v217
    %469 = vmatprep.subr.mxu0 0.0
    %470 = vmatpush1.msra.mxu0 %v216
    %471 = vmatprep.subr.mxu0 0.0
    %472 = vmatpush1.msra.mxu0 %v215
    %473 = vmatprep.subr.mxu0 0.0
    %474 = vmatpush1.msra.mxu0 %v214
    %475 = vmatprep.subr.mxu0 0.0
    %476 = vmatpush1.msra.mxu0 %v213
    %477 = vmatprep.subr.mxu0 0.0
    %478 = vmatpush1.msra.mxu0 %v212
    %479 = vmatprep.subr.mxu0 0.0
    %480 = vmatpush2.msra.mxu0 0.0
    %481 = vmatprep.subr.mxu0 0.0
    %482 = vmatpush2.msra.mxu0 0.0
    %483 = vmatprep.subr.mxu0 0.0
    %484 = vmatpush2.msra.mxu0 0.0
    %485 = vmatprep.subr.mxu0 0.0
    %486 = vmatpush2.msra.mxu0 0.0
    %487 = vmatprep.subr.mxu0 0.0
    %488 = vmatpush2.msra.mxu0 0.0
    %489 = vmatprep.subr.mxu0 0.0
    %490 = vmatpush2.msra.mxu0 0.0
    %491 = vmatprep.subr.mxu0 0.0
    %492 = vmatpush2.msra.mxu0 0.0
    %493 = vmatprep.subr.mxu0 0.0
    %494 = vmatpush2.msra.mxu0 0.0
    %495 = vmatprep.subr.mxu0 0.0
    %496 = vmatpush2.msra.mxu0 0.0
    %497 = vmatprep.subr.mxu0 0.0
    %498 = vmatpush2.msra.mxu0 0.0
    %499 = vmatprep.subr.mxu0 0.0
    %500 = vmatpush2.msra.mxu0 0.0
    %501 = vmatprep.subr.mxu0 0.0
    %502 = vmatpush2.msra.mxu0 0.0
    %503 = vmatprep.subr.mxu0 0.0
    %504 = vmatpush2.msra.mxu0 0.0
    %505 = vmatprep.subr.mxu0 0.0
    %506 = vmatpush2.msra.mxu0 0.0
    %507 = vmatprep.subr.mxu0 0.0
    %508 = vmatpush2.msra.mxu0 0.0
    %509 = vmatprep.subr.mxu0 0.0
    %510 = vmatpush2.msra.mxu0 0.0
    %511 = vmatprep.mubr.f32.mxu0 0.0
    %512 = vmatmul.mubr.f32.gmra.mxu0 %v445
    %v513 = vpop.f32.mrf.mxu0
    %v514 = vadd.f32 0.0, %v513
    %v515 = vpop.f32.mrf.mxu0
    %516 = vdwg.mxu0
    %v517 = vadd.f32 %v189, %v514
    %v518 = vtanh.pop %v517
    %519 = vst [vmem:[#allocation2 + $0x18] sm:$0xff] %v518
    %520 = vmatprep.subr.mxu0 0.0
    %521 = vmatpush1.msra.mxu0 %v227
    %522 = vmatprep.subr.mxu0 0.0
    %523 = vmatpush1.msra.mxu0 %v226
    %524 = vmatprep.subr.mxu0 0.0
    %525 = vmatpush1.msra.mxu0 %v225
    %526 = vmatprep.subr.mxu0 0.0
    %527 = vmatpush1.msra.mxu0 %v224
    %528 = vmatprep.subr.mxu0 0.0
    %529 = vmatpush1.msra.mxu0 %v223
    %530 = vmatprep.subr.mxu0 0.0
    %531 = vmatpush1.msra.mxu0 %v222
    %532 = vmatprep.subr.mxu0 0.0
    %533 = vmatpush1.msra.mxu0 %v221
    %534 = vmatprep.subr.mxu0 0.0
    %535 = vmatpush1.msra.mxu0 %v220
    %536 = vmatprep.subr.mxu0 0.0
    %537 = vmatpush1.msra.mxu0 %v219
    %538 = vmatprep.subr.mxu0 0.0
    %539 = vmatpush1.msra.mxu0 %v218
    %540 = vmatprep.subr.mxu0 0.0
    %541 = vmatpush1.msra.mxu0 %v217
    %542 = vmatprep.subr.mxu0 0.0
    %543 = vmatpush1.msra.mxu0 %v216
    %544 = vmatprep.subr.mxu0 0.0
    %545 = vmatpush1.msra.mxu0 %v215
    %546 = vmatprep.subr.mxu0 0.0
    %547 = vmatpush1.msra.mxu0 %v214
    %548 = vmatprep.subr.mxu0 0.0
    %549 = vmatpush1.msra.mxu0 %v213
    %550 = vmatprep.subr.mxu0 0.0
    %551 = vmatpush1.msra.mxu0 %v212
    %552 = vmatprep.subr.mxu0 0.0
    %553 = vmatpush2.msra.mxu0 0.0
    %554 = vmatprep.subr.mxu0 0.0
    %555 = vmatpush2.msra.mxu0 0.0
    %556 = vmatprep.subr.mxu0 0.0
    %557 = vmatpush2.msra.mxu0 0.0
    %558 = vmatprep.subr.mxu0 0.0
    %559 = vmatpush2.msra.mxu0 0.0
    %560 = vmatprep.subr.mxu0 0.0
    %561 = vmatpush2.msra.mxu0 0.0
    %562 = vmatprep.subr.mxu0 0.0
    %563 = vmatpush2.msra.mxu0 0.0
    %564 = vmatprep.subr.mxu0 0.0
    %565 = vmatpush2.msra.mxu0 0.0
    %566 = vmatprep.subr.mxu0 0.0
    %567 = vmatpush2.msra.mxu0 0.0
    %568 = vmatprep.subr.mxu0 0.0
    %569 = vmatpush2.msra.mxu0 0.0
    %570 = vmatprep.subr.mxu0 0.0
    %571 = vmatpush2.msra.mxu0 0.0
    %572 = vmatprep.subr.mxu0 0.0
    %573 = vmatpush2.msra.mxu0 0.0
    %574 = vmatprep.subr.mxu0 0.0
    %575 = vmatpush2.msra.mxu0 0.0
    %576 = vmatprep.subr.mxu0 0.0
    %577 = vmatpush2.msra.mxu0 0.0
    %578 = vmatprep.subr.mxu0 0.0
    %579 = vmatpush2.msra.mxu0 0.0
    %580 = vmatprep.subr.mxu0 0.0
    %581 = vmatpush2.msra.mxu0 0.0
    %582 = vmatprep.subr.mxu0 0.0
    %583 = vmatpush2.msra.mxu0 0.0
    %584 = vmatprep.mubr.f32.mxu0 0.0
    %585 = vmatmul.mubr.f32.gmra.mxu0 %v518
    %v586 = vpop.f32.mrf.mxu0
    %v587 = vadd.f32 0.0, %v586
    %v588 = vpop.f32.mrf.mxu0
    %589 = vdwg.mxu0
    %v590 = vadd.f32 %v194, %v587
    %v591 = vtanh.pop %v590
    %592 = vst [vmem:[#allocation2 + $0x20] sm:$0xff] %v591
    %593 = vmatprep.subr.mxu0 0.0
    %594 = vmatpush1.msra.mxu0 %v227
    %595 = vmatprep.subr.mxu0 0.0
    %596 = vmatpush1.msra.mxu0 %v226
    %597 = vmatprep.subr.mxu0 0.0
    %598 = vmatpush1.msra.mxu0 %v225
    %599 = vmatprep.subr.mxu0 0.0
    %600 = vmatpush1.msra.mxu0 %v224
    %601 = vmatprep.subr.mxu0 0.0
    %602 = vmatpush1.msra.mxu0 %v223
    %603 = vmatprep.subr.mxu0 0.0
    %604 = vmatpush1.msra.mxu0 %v222
    %605 = vmatprep.subr.mxu0 0.0
    %606 = vmatpush1.msra.mxu0 %v221
    %607 = vmatprep.subr.mxu0 0.0
    %608 = vmatpush1.msra.mxu0 %v220
    %609 = vmatprep.subr.mxu0 0.0
    %610 = vmatpush1.msra.mxu0 %v219
    %611 = vmatprep.subr.mxu0 0.0
    %612 = vmatpush1.msra.mxu0 %v218
    %613 = vmatprep.subr.mxu0 0.0
    %614 = vmatpush1.msra.mxu0 %v217
    %615 = vmatprep.subr.mxu0 0.0
    %616 = vmatpush1.msra.mxu0 %v216
    %617 = vmatprep.subr.mxu0 0.0
    %618 = vmatpush1.msra.mxu0 %v215
    %619 = vmatprep.subr.mxu0 0.0
    %620 = vmatpush1.msra.mxu0 %v214
    %621 = vmatprep.subr.mxu0 0.0
    %622 = vmatpush1.msra.mxu0 %v213
    %623 = vmatprep.subr.mxu0 0.0
    %624 = vmatpush1.msra.mxu0 %v212
    %625 = vmatprep.subr.mxu0 0.0
    %626 = vmatpush2.msra.mxu0 0.0
    %627 = vmatprep.subr.mxu0 0.0
    %628 = vmatpush2.msra.mxu0 0.0
    %629 = vmatprep.subr.mxu0 0.0
    %630 = vmatpush2.msra.mxu0 0.0
    %631 = vmatprep.subr.mxu0 0.0
    %632 = vmatpush2.msra.mxu0 0.0
    %633 = vmatprep.subr.mxu0 0.0
    %634 = vmatpush2.msra.mxu0 0.0
    %635 = vmatprep.subr.mxu0 0.0
    %636 = vmatpush2.msra.mxu0 0.0
    %637 = vmatprep.subr.mxu0 0.0
    %638 = vmatpush2.msra.mxu0 0.0
    %639 = vmatprep.subr.mxu0 0.0
    %640 = vmatpush2.msra.mxu0 0.0
    %641 = vmatprep.subr.mxu0 0.0
    %642 = vmatpush2.msra.mxu0 0.0
    %643 = vmatprep.subr.mxu0 0.0
    %644 = vmatpush2.msra.mxu0 0.0
    %645 = vmatprep.subr.mxu0 0.0
    %646 = vmatpush2.msra.mxu0 0.0
    %647 = vmatprep.subr.mxu0 0.0
    %648 = vmatpush2.msra.mxu0 0.0
    %649 = vmatprep.subr.mxu0 0.0
    %650 = vmatpush2.msra.mxu0 0.0
    %651 = vmatprep.subr.mxu0 0.0
    %652 = vmatpush2.msra.mxu0 0.0
    %653 = vmatprep.subr.mxu0 0.0
    %654 = vmatpush2.msra.mxu0 0.0
    %655 = vmatprep.subr.mxu0 0.0
    %656 = vmatpush2.msra.mxu0 0.0
    %657 = vmatprep.mubr.f32.mxu0 0.0
    %658 = vmatmul.mubr.f32.gmra.mxu0 %v591
    %v659 = vpop.f32.mrf.mxu0
    %v660 = vadd.f32 0.0, %v659
    %v661 = vpop.f32.mrf.mxu0
    %662 = vdwg.mxu0
    %v663 = vadd.f32 %v199, %v660
    %v664 = vtanh.pop %v663
    %665 = vst [vmem:[#allocation2 + $0x28] sm:$0xff] %v664
    %666 = vmatprep.subr.mxu0 0.0
    %667 = vmatpush1.msra.mxu0 %v227
    %668 = vmatprep.subr.mxu0 0.0
    %669 = vmatpush1.msra.mxu0 %v226
    %670 = vmatprep.subr.mxu0 0.0
    %671 = vmatpush1.msra.mxu0 %v225
    %672 = vmatprep.subr.mxu0 0.0
    %673 = vmatpush1.msra.mxu0 %v224
    %674 = vmatprep.subr.mxu0 0.0
    %675 = vmatpush1.msra.mxu0 %v223
    %676 = vmatprep.subr.mxu0 0.0
    %677 = vmatpush1.msra.mxu0 %v222
    %678 = vmatprep.subr.mxu0 0.0
    %679 = vmatpush1.msra.mxu0 %v221
    %680 = vmatprep.subr.mxu0 0.0
    %681 = vmatpush1.msra.mxu0 %v220
    %682 = vmatprep.subr.mxu0 0.0
    %683 = vmatpush1.msra.mxu0 %v219
    %684 = vmatprep.subr.mxu0 0.0
    %685 = vmatpush1.msra.mxu0 %v218
    %686 = vmatprep.subr.mxu0 0.0
    %687 = vmatpush1.msra.mxu0 %v217
    %688 = vmatprep.subr.mxu0 0.0
    %689 = vmatpush1.msra.mxu0 %v216
    %690 = vmatprep.subr.mxu0 0.0
    %691 = vmatpush1.msra.mxu0 %v215
    %692 = vmatprep.subr.mxu0 0.0
    %693 = vmatpush1.msra.mxu0 %v214
    %694 = vmatprep.subr.mxu0 0.0
    %695 = vmatpush1.msra.mxu0 %v213
    %696 = vmatprep.subr.mxu0 0.0
    %697 = vmatpush1.msra.mxu0 %v212
    %698 = vmatprep.subr.mxu0 0.0
    %699 = vmatpush2.msra.mxu0 0.0
    %700 = vmatprep.subr.mxu0 0.0
    %701 = vmatpush2.msra.mxu0 0.0
    %702 = vmatprep.subr.mxu0 0.0
    %703 = vmatpush2.msra.mxu0 0.0
    %704 = vmatprep.subr.mxu0 0.0
    %705 = vmatpush2.msra.mxu0 0.0
    %706 = vmatprep.subr.mxu0 0.0
    %707 = vmatpush2.msra.mxu0 0.0
    %708 = vmatprep.subr.mxu0 0.0
    %709 = vmatpush2.msra.mxu0 0.0
    %710 = vmatprep.subr.mxu0 0.0
    %711 = vmatpush2.msra.mxu0 0.0
    %712 = vmatprep.subr.mxu0 0.0
    %713 = vmatpush2.msra.mxu0 0.0
    %714 = vmatprep.subr.mxu0 0.0
    %715 = vmatpush2.msra.mxu0 0.0
    %716 = vmatprep.subr.mxu0 0.0
    %717 = vmatpush2.msra.mxu0 0.0
    %718 = vmatprep.subr.mxu0 0.0
    %719 = vmatpush2.msra.mxu0 0.0
    %720 = vmatprep.subr.mxu0 0.0
    %721 = vmatpush2.msra.mxu0 0.0
    %722 = vmatprep.subr.mxu0 0.0
    %723 = vmatpush2.msra.mxu0 0.0
    %724 = vmatprep.subr.mxu0 0.0
    %725 = vmatpush2.msra.mxu0 0.0
    %726 = vmatprep.subr.mxu0 0.0
    %727 = vmatpush2.msra.mxu0 0.0
    %728 = vmatprep.subr.mxu0 0.0
    %729 = vmatpush2.msra.mxu0 0.0
    %730 = vmatprep.mubr.f32.mxu0 0.0
    %731 = vmatmul.mubr.f32.gmra.mxu0 %v664
    %v732 = vpop.f32.mrf.mxu0
    %v733 = vadd.f32 0.0, %v732
    %v734 = vpop.f32.mrf.mxu0
    %735 = vdwg.mxu0
    %v736 = vadd.f32 %v204, %v733
    %v737 = vtanh.pop %v736
    %738 = vst [vmem:[#allocation2 + $0x30] sm:$0xff] %v737
    %739 = vmatprep.subr.mxu0 0.0
    %740 = vmatpush1.msra.mxu0 %v227
    %741 = vmatprep.subr.mxu0 0.0
    %742 = vmatpush1.msra.mxu0 %v226
    %743 = vmatprep.subr.mxu0 0.0
    %744 = vmatpush1.msra.mxu0 %v225
    %745 = vmatprep.subr.mxu0 0.0
    %746 = vmatpush1.msra.mxu0 %v224
    %747 = vmatprep.subr.mxu0 0.0
    %748 = vmatpush1.msra.mxu0 %v223
    %749 = vmatprep.subr.mxu0 0.0
    %750 = vmatpush1.msra.mxu0 %v222
    %751 = vmatprep.subr.mxu0 0.0
    %752 = vmatpush1.msra.mxu0 %v221
    %753 = vmatprep.subr.mxu0 0.0
    %754 = vmatpush1.msra.mxu0 %v220
    %755 = vmatprep.subr.mxu0 0.0
    %756 = vmatpush1.msra.mxu0 %v219
    %757 = vmatprep.subr.mxu0 0.0
    %758 = vmatpush1.msra.mxu0 %v218
    %759 = vmatprep.subr.mxu0 0.0
    %760 = vmatpush1.msra.mxu0 %v217
    %761 = vmatprep.subr.mxu0 0.0
    %762 = vmatpush1.msra.mxu0 %v216
    %763 = vmatprep.subr.mxu0 0.0
    %764 = vmatpush1.msra.mxu0 %v215
    %765 = vmatprep.subr.mxu0 0.0
    %766 = vmatpush1.msra.mxu0 %v214
    %767 = vmatprep.subr.mxu0 0.0
    %768 = vmatpush1.msra.mxu0 %v213
    %769 = vmatprep.subr.mxu0 0.0
    %770 = vmatpush1.msra.mxu0 %v212
    %771 = vmatprep.subr.mxu0 0.0
    %772 = vmatpush2.msra.mxu0 0.0
    %773 = vmatprep.subr.mxu0 0.0
    %774 = vmatpush2.msra.mxu0 0.0
    %775 = vmatprep.subr.mxu0 0.0
    %776 = vmatpush2.msra.mxu0 0.0
    %777 = vmatprep.subr.mxu0 0.0
    %778 = vmatpush2.msra.mxu0 0.0
    %779 = vmatprep.subr.mxu0 0.0
    %780 = vmatpush2.msra.mxu0 0.0
    %781 = vmatprep.subr.mxu0 0.0
    %782 = vmatpush2.msra.mxu0 0.0
    %783 = vmatprep.subr.mxu0 0.0
    %784 = vmatpush2.msra.mxu0 0.0
    %785 = vmatprep.subr.mxu0 0.0
    %786 = vmatpush2.msra.mxu0 0.0
    %787 = vmatprep.subr.mxu0 0.0
    %788 = vmatpush2.msra.mxu0 0.0
    %789 = vmatprep.subr.mxu0 0.0
    %790 = vmatpush2.msra.mxu0 0.0
    %791 = vmatprep.subr.mxu0 0.0
    %792 = vmatpush2.msra.mxu0 0.0
    %793 = vmatprep.subr.mxu0 0.0
    %794 = vmatpush2.msra.mxu0 0.0
    %795 = vmatprep.subr.mxu0 0.0
    %796 = vmatpush2.msra.mxu0 0.0
    %797 = vmatprep.subr.mxu0 0.0
    %798 = vmatpush2.msra.mxu0 0.0
    %799 = vmatprep.subr.mxu0 0.0
    %800 = vmatpush2.msra.mxu0 0.0
    %801 = vmatprep.subr.mxu0 0.0
    %802 = vmatpush2.msra.mxu0 0.0
    %803 = vmatprep.mubr.f32.mxu0 0.0
    %804 = vmatmul.mubr.f32.gmra.mxu0 %v737
    %v805 = vpop.f32.mrf.mxu0
    %v806 = vadd.f32 0.0, %v805
    %v807 = vpop.f32.mrf.mxu0
    %808 = vdwg.mxu0
    %v809 = vadd.f32 %v209, %v806
    %v810 = vtanh.pop %v809
    %811 = vst [vmem:[#allocation2 + $0x38] sm:$0xff] %v810
    %v812 = vlaneseq
    %v813 = vshrl.u32 %v812, 7
    %v814 = vadd.s32 %v813, 8
    %v815 = vadd.s32 %v813, 16
    %v816 = vadd.s32 %v813, 24
    %v817 = vadd.s32 %v813, 32
    %v818 = vadd.s32 %v813, 40
    %v819 = vadd.s32 %v813, 48
    %v820 = vadd.s32 %v813, 56
    %vm821 = vcmp.lt.s32.totalorder %v813, 0
    %v822 = vsub.s32 0, %v813
    %v823 = vsel %vm821, %v822, %v813
    %v824 = vshrl.u32 %v823, 3
    %v825 = vand.u32 %v823, 7
    %v826 = vsub.s32 0, %v825
    %v827 = vsel %vm821, %v826, %v825
    %vm828 = vcmp.lt.s32.totalorder %v814, 0
    %v829 = vsub.s32 0, %v814
    %v830 = vsel %vm828, %v829, %v814
    %v831 = vshrl.u32 %v830, 3
    %v832 = vand.u32 %v830, 7
    %v833 = vsub.s32 0, %v832
    %v834 = vsel %vm828, %v833, %v832
    %vm835 = vcmp.lt.s32.totalorder %v815, 0
    %v836 = vsub.s32 0, %v815
    %v837 = vsel %vm835, %v836, %v815
    %v838 = vshrl.u32 %v837, 3
    %v839 = vand.u32 %v837, 7
    %v840 = vsub.s32 0, %v839
    %v841 = vsel %vm835, %v840, %v839
    %vm842 = vcmp.lt.s32.totalorder %v816, 0
    %v843 = vsub.s32 0, %v816
    %v844 = vsel %vm842, %v843, %v816
    %v845 = vshrl.u32 %v844, 3
    %v846 = vand.u32 %v844, 7
    %v847 = vsub.s32 0, %v846
    %v848 = vsel %vm842, %v847, %v846
    %vm849 = vcmp.lt.s32.totalorder %v817, 0
    %v850 = vsub.s32 0, %v817
    %v851 = vsel %vm849, %v850, %v817
    %v852 = vshrl.u32 %v851, 3
    %v853 = vand.u32 %v851, 7
    %v854 = vsub.s32 0, %v853
    %v855 = vsel %vm849, %v854, %v853
    %vm856 = vcmp.lt.s32.totalorder %v818, 0
    %v857 = vsub.s32 0, %v818
    %v858 = vsel %vm856, %v857, %v818
    %v859 = vshrl.u32 %v858, 3
    %v860 = vand.u32 %v858, 7
    %v861 = vsub.s32 0, %v860
    %v862 = vsel %vm856, %v861, %v860
    %vm863 = vcmp.lt.s32.totalorder %v819, 0
    %v864 = vsub.s32 0, %v819
    %v865 = vsel %vm863, %v864, %v819
    %v866 = vshrl.u32 %v865, 3
    %v867 = vand.u32 %v865, 7
    %v868 = vsub.s32 0, %v867
    %v869 = vsel %vm863, %v868, %v867
    %vm870 = vcmp.lt.s32.totalorder %v820, 0
    %v871 = vsub.s32 0, %v820
    %v872 = vsel %vm870, %v871, %v820
    %v873 = vshrl.u32 %v872, 3
    %v874 = vand.u32 %v872, 7
    %v875 = vsub.s32 0, %v874
    %v876 = vsel %vm870, %v875, %v874
    %vm877 = vcmp.ne.s32.totalorder %v827, 0
    %vm878 = vcmp.ne.s32.totalorder %v834, 0
    %vm879 = vcmp.ne.s32.totalorder %v841, 0
    %vm880 = vcmp.ne.s32.totalorder %v848, 0
    %vm881 = vcmp.ne.s32.totalorder %v855, 0
    %vm882 = vcmp.ne.s32.totalorder %v862, 0
    %vm883 = vcmp.ne.s32.totalorder %v869, 0
    %vm884 = vcmp.ne.s32.totalorder %v876, 0
    %vm885 = vcmp.lt.s32.totalorder %v827, 0
    %vm886 = vcmp.lt.s32.totalorder %v834, 0
    %vm887 = vcmp.lt.s32.totalorder %v841, 0
    %vm888 = vcmp.lt.s32.totalorder %v848, 0
    %vm889 = vcmp.lt.s32.totalorder %v855, 0
    %vm890 = vcmp.lt.s32.totalorder %v862, 0
    %vm891 = vcmp.lt.s32.totalorder %v869, 0
    %vm892 = vcmp.lt.s32.totalorder %v876, 0
    %vm893 = vmand %vm885, %vm877
    %vm894 = vmand %vm886, %vm878
    %vm895 = vmand %vm887, %vm879
    %vm896 = vmand %vm888, %vm880
    %vm897 = vmand %vm889, %vm881
    %vm898 = vmand %vm890, %vm882
    %vm899 = vmand %vm891, %vm883
    %vm900 = vmand %vm892, %vm884
    %v901 = vadd.s32 %v827, 8
    %v902 = vadd.s32 %v834, 8
    %v903 = vadd.s32 %v841, 8
    %v904 = vadd.s32 %v848, 8
    %v905 = vadd.s32 %v855, 8
    %v906 = vadd.s32 %v862, 8
    %v907 = vadd.s32 %v869, 8
    %v908 = vadd.s32 %v876, 8
    %v909 = vsel %vm893, %v901, %v827
    %v910 = vsel %vm894, %v902, %v834
    %v911 = vsel %vm895, %v903, %v841
    %v912 = vsel %vm896, %v904, %v848
    %v913 = vsel %vm897, %v905, %v855
    %v914 = vsel %vm898, %v906, %v862
    %v915 = vsel %vm899, %v907, %v869
    %v916 = vsel %vm900, %v908, %v876
    %vm917 = vcmp.lt.s32.totalorder %v909, 4
    %vm918 = vcmp.lt.s32.totalorder %v910, 4
    %vm919 = vcmp.lt.s32.totalorder %v911, 4
    %vm920 = vcmp.lt.s32.totalorder %v912, 4
    %vm921 = vcmp.lt.s32.totalorder %v913, 4
    %vm922 = vcmp.lt.s32.totalorder %v914, 4
    %vm923 = vcmp.lt.s32.totalorder %v915, 4
    %vm924 = vcmp.lt.s32.totalorder %v916, 4
    %v925 = vld [vmem:[#allocation2] sm:$0xff]
    %v926 = vld [vmem:[#allocation2 + $0x8] sm:$0xff]
    %v927 = vld [vmem:[#allocation2 + $0x10] sm:$0xff]
    %v928 = vld [vmem:[#allocation2 + $0x18] sm:$0xff]
    %v929 = vld [vmem:[#allocation2 + $0x20] sm:$0xff]
    %v930 = vld [vmem:[#allocation2 + $0x28] sm:$0xff]
    %v931 = vld [vmem:[#allocation2 + $0x30] sm:$0xff]
    %v932 = vld [vmem:[#allocation2 + $0x38] sm:$0xff]
    %v933 = vsel %vm917, 1, 0
    %v934 = vsel %vm918, 1, 0
    %v935 = vsel %vm919, 1, 0
    %v936 = vsel %vm920, 1, 0
    %v937 = vsel %vm921, 1, 0
    %v938 = vsel %vm922, 1, 0
    %v939 = vsel %vm923, 1, 0
    %v940 = vsel %vm924, 1, 0
    %vm941 = vcmp.eq.s32.totalorder %v933, 1
    %vm942 = vcmp.eq.s32.totalorder %v934, 1
    %vm943 = vcmp.eq.s32.totalorder %v935, 1
    %vm944 = vcmp.eq.s32.totalorder %v936, 1
    %vm945 = vcmp.eq.s32.totalorder %v937, 1
    %vm946 = vcmp.eq.s32.totalorder %v938, 1
    %vm947 = vcmp.eq.s32.totalorder %v939, 1
    %vm948 = vcmp.eq.s32.totalorder %v940, 1
    %v949 = vsel %vm941, %v925, 0.0
    %v950 = vsel %vm942, %v926, 0.0
    %v951 = vsel %vm943, %v927, 0.0
    %v952 = vsel %vm944, %v928, 0.0
    %v953 = vsel %vm945, %v929, 0.0
    %v954 = vsel %vm946, %v930, 0.0
    %v955 = vsel %vm947, %v931, 0.0
    %v956 = vsel %vm948, %v932, 0.0
    %v957 = vrot.slane %v949, 7
    %v958 = vrot.slane %v950, 7
    %v959 = vrot.slane %v951, 7
    %v960 = vrot.slane %v952, 7
    %v961 = vrot.slane %v953, 7
    %v962 = vrot.slane %v954, 7
    %v963 = vrot.slane %v955, 7
    %v964 = vrot.slane %v956, 7
    %vm965 = vcmp.lt.s32.totalorder %v813, 1
    %v966 = vsel %vm965, %v963, %v964
    %v967 = vsel %vm965, %v962, %v963
    %v968 = vsel %vm965, %v961, %v962
    %v969 = vsel %vm965, %v960, %v961
    %v970 = vsel %vm965, %v959, %v960
    %v971 = vsel %vm965, %v958, %v959
    %v972 = vsel %vm965, %v957, %v958
    %v973 = vsel %vm965, %v964, %v957
    %v974 = vld [vmem:[#allocation9] sm:$0xff]
    %v975 = vld [vmem:[#allocation9 + $0x8] sm:$0xff]
    %v976 = vld [vmem:[#allocation9 + $0x10] sm:$0xff]
    %v977 = vld [vmem:[#allocation9 + $0x18] sm:$0xff]
    %v978 = vld [vmem:[#allocation9 + $0x20] sm:$0xff]
    %v979 = vld [vmem:[#allocation9 + $0x28] sm:$0xff]
    %v980 = vld [vmem:[#allocation9 + $0x30] sm:$0xff]
    %v981 = vld [vmem:[#allocation9 + $0x38] sm:$0xff]
    %v982 = vld [vmem:[#allocation9 + $0x40] sm:$0xff]
    %v983 = vld [vmem:[#allocation9 + $0x48] sm:$0xff]
    %v984 = vld [vmem:[#allocation9 + $0x50] sm:$0xff]
    %v985 = vld [vmem:[#allocation9 + $0x58] sm:$0xff]
    %v986 = vld [vmem:[#allocation9 + $0x60] sm:$0xff]
    %v987 = vld [vmem:[#allocation9 + $0x68] sm:$0xff]
    %v988 = vld [vmem:[#allocation9 + $0x70] sm:$0xff]
    %v989 = vld [vmem:[#allocation9 + $0x78] sm:$0xff]
    %v990 = vld [vmem:[#allocation9 + $0x80] sm:$0xff]
    %v991 = vld [vmem:[#allocation9 + $0x88] sm:$0xff]
    %v992 = vld [vmem:[#allocation9 + $0x90] sm:$0xff]
    %v993 = vld [vmem:[#allocation9 + $0x98] sm:$0xff]
    %v994 = vld [vmem:[#allocation9 + $0xa0] sm:$0xff]
    %v995 = vld [vmem:[#allocation9 + $0xa8] sm:$0xff]
    %v996 = vld [vmem:[#allocation9 + $0xb0] sm:$0xff]
    %v997 = vld [vmem:[#allocation9 + $0xb8] sm:$0xff]
    %v998 = vld [vmem:[#allocation9 + $0xc0] sm:$0xff]
    %v999 = vld [vmem:[#allocation9 + $0xc8] sm:$0xff]
    %v1000 = vld [vmem:[#allocation9 + $0xd0] sm:$0xff]
    %v1001 = vld [vmem:[#allocation9 + $0xd8] sm:$0xff]
    %v1002 = vld [vmem:[#allocation9 + $0xe0] sm:$0xff]
    %v1003 = vld [vmem:[#allocation9 + $0xe8] sm:$0xff]
    %v1004 = vld [vmem:[#allocation9 + $0xf0] sm:$0xff]
    %v1005 = vld [vmem:[#allocation9 + $0xf8] sm:$0xff]
    %s1006 = scalar_lea.vmem [#allocation9], 256
    %v1007 = vld [vmem:[%s1006] sm:$0xff]
    %v1008 = vld [vmem:[%s1006 + $0x8] sm:$0xff]
    %v1009 = vld [vmem:[%s1006 + $0x10] sm:$0xff]
    %v1010 = vld [vmem:[%s1006 + $0x18] sm:$0xff]
    %v1011 = vld [vmem:[%s1006 + $0x20] sm:$0xff]
    %v1012 = vld [vmem:[%s1006 + $0x28] sm:$0xff]
    %v1013 = vld [vmem:[%s1006 + $0x30] sm:$0xff]
    %v1014 = vld [vmem:[%s1006 + $0x38] sm:$0xff]
    %v1015 = vld [vmem:[%s1006 + $0x40] sm:$0xff]
    %v1016 = vld [vmem:[%s1006 + $0x48] sm:$0xff]
    %v1017 = vld [vmem:[%s1006 + $0x50] sm:$0xff]
    %v1018 = vld [vmem:[%s1006 + $0x58] sm:$0xff]
    %v1019 = vld [vmem:[%s1006 + $0x60] sm:$0xff]
    %v1020 = vld [vmem:[%s1006 + $0x68] sm:$0xff]
    %v1021 = vld [vmem:[%s1006 + $0x70] sm:$0xff]
    %v1022 = vld [vmem:[%s1006 + $0x78] sm:$0xff]
    %v1023 = vld [vmem:[%s1006 + $0x80] sm:$0xff]
    %v1024 = vld [vmem:[%s1006 + $0x88] sm:$0xff]
    %v1025 = vld [vmem:[%s1006 + $0x90] sm:$0xff]
    %v1026 = vld [vmem:[%s1006 + $0x98] sm:$0xff]
    %v1027 = vld [vmem:[%s1006 + $0xa0] sm:$0xff]
    %v1028 = vld [vmem:[%s1006 + $0xa8] sm:$0xff]
    %v1029 = vld [vmem:[%s1006 + $0xb0] sm:$0xff]
    %v1030 = vld [vmem:[%s1006 + $0xb8] sm:$0xff]
    %v1031 = vld [vmem:[%s1006 + $0xc0] sm:$0xff]
    %v1032 = vld [vmem:[%s1006 + $0xc8] sm:$0xff]
    %v1033 = vld [vmem:[%s1006 + $0xd0] sm:$0xff]
    %v1034 = vld [vmem:[%s1006 + $0xd8] sm:$0xff]
    %v1035 = vld [vmem:[%s1006 + $0xe0] sm:$0xff]
    %v1036 = vld [vmem:[%s1006 + $0xe8] sm:$0xff]
    %v1037 = vld [vmem:[%s1006 + $0xf0] sm:$0xff]
    %v1038 = vld [vmem:[%s1006 + $0xf8] sm:$0xff]
    %1039 = vmatprep.subr.mxu0 %v1038
    %1040 = vmatpush1.msra.mxu0 %v1037
    %1041 = vmatprep.subr.mxu0 %v1036
    %1042 = vmatpush1.msra.mxu0 %v1035
    %1043 = vmatprep.subr.mxu0 %v1034
    %1044 = vmatpush1.msra.mxu0 %v1033
    %1045 = vmatprep.subr.mxu0 %v1032
    %1046 = vmatpush1.msra.mxu0 %v1031
    %1047 = vmatprep.subr.mxu0 %v1030
    %1048 = vmatpush1.msra.mxu0 %v1029
    %1049 = vmatprep.subr.mxu0 %v1028
    %1050 = vmatpush1.msra.mxu0 %v1027
    %1051 = vmatprep.subr.mxu0 %v1026
    %1052 = vmatpush1.msra.mxu0 %v1025
    %1053 = vmatprep.subr.mxu0 %v1024
    %1054 = vmatpush1.msra.mxu0 %v1023
    %1055 = vmatprep.subr.mxu0 %v1022
    %1056 = vmatpush1.msra.mxu0 %v1021
    %1057 = vmatprep.subr.mxu0 %v1020
    %1058 = vmatpush1.msra.mxu0 %v1019
    %1059 = vmatprep.subr.mxu0 %v1018
    %1060 = vmatpush1.msra.mxu0 %v1017
    %1061 = vmatprep.subr.mxu0 %v1016
    %1062 = vmatpush1.msra.mxu0 %v1015
    %1063 = vmatprep.subr.mxu0 %v1014
    %1064 = vmatpush1.msra.mxu0 %v1013
    %1065 = vmatprep.subr.mxu0 %v1012
    %1066 = vmatpush1.msra.mxu0 %v1011
    %1067 = vmatprep.subr.mxu0 %v1010
    %1068 = vmatpush1.msra.mxu0 %v1009
    %1069 = vmatprep.subr.mxu0 %v1008
    %1070 = vmatpush1.msra.mxu0 %v1007
    %1071 = vmatprep.subr.mxu0 0.0
    %1072 = vmatpush2.msra.mxu0 0.0
    %1073 = vmatprep.subr.mxu0 0.0
    %1074 = vmatpush2.msra.mxu0 0.0
    %1075 = vmatprep.subr.mxu0 0.0
    %1076 = vmatpush2.msra.mxu0 0.0
    %1077 = vmatprep.subr.mxu0 0.0
    %1078 = vmatpush2.msra.mxu0 0.0
    %1079 = vmatprep.subr.mxu0 0.0
    %1080 = vmatpush2.msra.mxu0 0.0
    %1081 = vmatprep.subr.mxu0 0.0
    %1082 = vmatpush2.msra.mxu0 0.0
    %1083 = vmatprep.subr.mxu0 0.0
    %1084 = vmatpush2.msra.mxu0 0.0
    %1085 = vmatprep.subr.mxu0 0.0
    %1086 = vmatpush2.msra.mxu0 0.0
    %1087 = vmatprep.subr.mxu0 0.0
    %1088 = vmatpush2.msra.mxu0 0.0
    %1089 = vmatprep.subr.mxu0 0.0
    %1090 = vmatpush2.msra.mxu0 0.0
    %1091 = vmatprep.subr.mxu0 0.0
    %1092 = vmatpush2.msra.mxu0 0.0
    %1093 = vmatprep.subr.mxu0 0.0
    %1094 = vmatpush2.msra.mxu0 0.0
    %1095 = vmatprep.subr.mxu0 0.0
    %1096 = vmatpush2.msra.mxu0 0.0
    %1097 = vmatprep.subr.mxu0 0.0
    %1098 = vmatpush2.msra.mxu0 0.0
    %1099 = vmatprep.subr.mxu0 0.0
    %1100 = vmatpush2.msra.mxu0 0.0
    %1101 = vmatprep.subr.mxu0 0.0
    %1102 = vmatpush2.msra.mxu0 0.0
    %1103 = vmatprep.mubr.f32.mxu0 0.0
    %1104 = vmatmul.mubr.f32.gmra.mxu0 %v949
    %v1105 = vpop.f32.mrf.mxu0
    %v1106 = vadd.f32 0.0, %v1105
    %v1107 = vpop.f32.mrf.mxu0
    %v1108 = vadd.f32 0.0, %v1107
    %1109 = vmatprep.mubr.f32.mxu0 0.0
    %1110 = vmatmul.mubr.f32.gmra.mxu0 %v950
    %v1111 = vpop.f32.mrf.mxu0
    %v1112 = vadd.f32 0.0, %v1111
    %v1113 = vpop.f32.mrf.mxu0
    %v1114 = vadd.f32 0.0, %v1113
    %1115 = vmatprep.mubr.f32.mxu0 0.0
    %1116 = vmatmul.mubr.f32.gmra.mxu0 %v951
    %v1117 = vpop.f32.mrf.mxu0
    %v1118 = vadd.f32 0.0, %v1117
    %v1119 = vpop.f32.mrf.mxu0
    %v1120 = vadd.f32 0.0, %v1119
    %1121 = vmatprep.mubr.f32.mxu0 0.0
    %1122 = vmatmul.mubr.f32.gmra.mxu0 %v952
    %v1123 = vpop.f32.mrf.mxu0
    %v1124 = vadd.f32 0.0, %v1123
    %v1125 = vpop.f32.mrf.mxu0
    %v1126 = vadd.f32 0.0, %v1125
    %1127 = vmatprep.mubr.f32.mxu0 0.0
    %1128 = vmatmul.mubr.f32.gmra.mxu0 %v953
    %v1129 = vpop.f32.mrf.mxu0
    %v1130 = vadd.f32 0.0, %v1129
    %v1131 = vpop.f32.mrf.mxu0
    %v1132 = vadd.f32 0.0, %v1131
    %1133 = vmatprep.mubr.f32.mxu0 0.0
    %1134 = vmatmul.mubr.f32.gmra.mxu0 %v954
    %v1135 = vpop.f32.mrf.mxu0
    %v1136 = vadd.f32 0.0, %v1135
    %v1137 = vpop.f32.mrf.mxu0
    %v1138 = vadd.f32 0.0, %v1137
    %1139 = vmatprep.mubr.f32.mxu0 0.0
    %1140 = vmatmul.mubr.f32.gmra.mxu0 %v955
    %v1141 = vpop.f32.mrf.mxu0
    %v1142 = vadd.f32 0.0, %v1141
    %v1143 = vpop.f32.mrf.mxu0
    %v1144 = vadd.f32 0.0, %v1143
    %1145 = vmatprep.mubr.f32.mxu0 0.0
    %1146 = vmatmul.mubr.f32.gmra.mxu0 %v956
    %v1147 = vpop.f32.mrf.mxu0
    %v1148 = vadd.f32 0.0, %v1147
    %v1149 = vpop.f32.mrf.mxu0
    %v1150 = vadd.f32 0.0, %v1149
    %1151 = vdwg.mxu0
    %1152 = vmatprep.subr.mxu0 %v1005
    %1153 = vmatpush1.msra.mxu0 %v1004
    %1154 = vmatprep.subr.mxu0 %v1003
    %1155 = vmatpush1.msra.mxu0 %v1002
    %1156 = vmatprep.subr.mxu0 %v1001
    %1157 = vmatpush1.msra.mxu0 %v1000
    %1158 = vmatprep.subr.mxu0 %v999
    %1159 = vmatpush1.msra.mxu0 %v998
    %1160 = vmatprep.subr.mxu0 %v997
    %1161 = vmatpush1.msra.mxu0 %v996
    %1162 = vmatprep.subr.mxu0 %v995
    %1163 = vmatpush1.msra.mxu0 %v994
    %1164 = vmatprep.subr.mxu0 %v993
    %1165 = vmatpush1.msra.mxu0 %v992
    %1166 = vmatprep.subr.mxu0 %v991
    %1167 = vmatpush1.msra.mxu0 %v990
    %1168 = vmatprep.subr.mxu0 %v989
    %1169 = vmatpush1.msra.mxu0 %v988
    %1170 = vmatprep.subr.mxu0 %v987
    %1171 = vmatpush1.msra.mxu0 %v986
    %1172 = vmatprep.subr.mxu0 %v985
    %1173 = vmatpush1.msra.mxu0 %v984
    %1174 = vmatprep.subr.mxu0 %v983
    %1175 = vmatpush1.msra.mxu0 %v982
    %1176 = vmatprep.subr.mxu0 %v981
    %1177 = vmatpush1.msra.mxu0 %v980
    %1178 = vmatprep.subr.mxu0 %v979
    %1179 = vmatpush1.msra.mxu0 %v978
    %1180 = vmatprep.subr.mxu0 %v977
    %1181 = vmatpush1.msra.mxu0 %v976
    %1182 = vmatprep.subr.mxu0 %v975
    %1183 = vmatpush1.msra.mxu0 %v974
    %1184 = vmatprep.subr.mxu0 0.0
    %1185 = vmatpush2.msra.mxu0 0.0
    %1186 = vmatprep.subr.mxu0 0.0
    %1187 = vmatpush2.msra.mxu0 0.0
    %1188 = vmatprep.subr.mxu0 0.0
    %1189 = vmatpush2.msra.mxu0 0.0
    %1190 = vmatprep.subr.mxu0 0.0
    %1191 = vmatpush2.msra.mxu0 0.0
    %1192 = vmatprep.subr.mxu0 0.0
    %1193 = vmatpush2.msra.mxu0 0.0
    %1194 = vmatprep.subr.mxu0 0.0
    %1195 = vmatpush2.msra.mxu0 0.0
    %1196 = vmatprep.subr.mxu0 0.0
    %1197 = vmatpush2.msra.mxu0 0.0
    %1198 = vmatprep.subr.mxu0 0.0
    %1199 = vmatpush2.msra.mxu0 0.0
    %1200 = vmatprep.subr.mxu0 0.0
    %1201 = vmatpush2.msra.mxu0 0.0
    %1202 = vmatprep.subr.mxu0 0.0
    %1203 = vmatpush2.msra.mxu0 0.0
    %1204 = vmatprep.subr.mxu0 0.0
    %1205 = vmatpush2.msra.mxu0 0.0
    %1206 = vmatprep.subr.mxu0 0.0
    %1207 = vmatpush2.msra.mxu0 0.0
    %1208 = vmatprep.subr.mxu0 0.0
    %1209 = vmatpush2.msra.mxu0 0.0
    %1210 = vmatprep.subr.mxu0 0.0
    %1211 = vmatpush2.msra.mxu0 0.0
    %1212 = vmatprep.subr.mxu0 0.0
    %1213 = vmatpush2.msra.mxu0 0.0
    %1214 = vmatprep.subr.mxu0 0.0
    %1215 = vmatpush2.msra.mxu0 0.0
    %1216 = vmatprep.mubr.f32.mxu0 0.0
    %1217 = vmatmul.mubr.f32.gmra.mxu0 %v973
    %v1218 = vpop.f32.mrf.mxu0
    %v1219 = vadd.f32 %v1106, %v1218
    %v1220 = vpop.f32.mrf.mxu0
    %v1221 = vadd.f32 %v1108, %v1220
    %1222 = vmatprep.mubr.f32.mxu0 0.0
    %1223 = vmatmul.mubr.f32.gmra.mxu0 %v972
    %v1224 = vpop.f32.mrf.mxu0
    %v1225 = vadd.f32 %v1112, %v1224
    %v1226 = vpop.f32.mrf.mxu0
    %v1227 = vadd.f32 %v1114, %v1226
    %1228 = vmatprep.mubr.f32.mxu0 0.0
    %1229 = vmatmul.mubr.f32.gmra.mxu0 %v971
    %v1230 = vpop.f32.mrf.mxu0
    %v1231 = vadd.f32 %v1118, %v1230
    %v1232 = vpop.f32.mrf.mxu0
    %v1233 = vadd.f32 %v1120, %v1232
    %1234 = vmatprep.mubr.f32.mxu0 0.0
    %1235 = vmatmul.mubr.f32.gmra.mxu0 %v970
    %v1236 = vpop.f32.mrf.mxu0
    %v1237 = vadd.f32 %v1124, %v1236
    %v1238 = vpop.f32.mrf.mxu0
    %v1239 = vadd.f32 %v1126, %v1238
    %1240 = vmatprep.mubr.f32.mxu0 0.0
    %1241 = vmatmul.mubr.f32.gmra.mxu0 %v969
    %v1242 = vpop.f32.mrf.mxu0
    %v1243 = vadd.f32 %v1130, %v1242
    %v1244 = vpop.f32.mrf.mxu0
    %v1245 = vadd.f32 %v1132, %v1244
    %1246 = vmatprep.mubr.f32.mxu0 0.0
    %1247 = vmatmul.mubr.f32.gmra.mxu0 %v968
    %v1248 = vpop.f32.mrf.mxu0
    %v1249 = vadd.f32 %v1136, %v1248
    %v1250 = vpop.f32.mrf.mxu0
    %v1251 = vadd.f32 %v1138, %v1250
    %1252 = vmatprep.mubr.f32.mxu0 0.0
    %1253 = vmatmul.mubr.f32.gmra.mxu0 %v967
    %v1254 = vpop.f32.mrf.mxu0
    %v1255 = vadd.f32 %v1142, %v1254
    %v1256 = vpop.f32.mrf.mxu0
    %v1257 = vadd.f32 %v1144, %v1256
    %1258 = vmatprep.mubr.f32.mxu0 0.0
    %1259 = vmatmul.mubr.f32.gmra.mxu0 %v966
    %v1260 = vpop.f32.mrf.mxu0
    %v1261 = vadd.f32 %v1148, %v1260
    %v1262 = vpop.f32.mrf.mxu0
    %v1263 = vadd.f32 %v1150, %v1262
    %1264 = vdwg.mxu0
    %v1265 = vrot.slane %v949, 1
    %v1266 = vrot.slane %v950, 1
    %v1267 = vrot.slane %v951, 1
    %v1268 = vrot.slane %v952, 1
    %v1269 = vrot.slane %v953, 1
    %v1270 = vrot.slane %v954, 1
    %v1271 = vrot.slane %v955, 1
    %v1272 = vrot.slane %v956, 1
    %vm1273 = vcmp.lt.s32.totalorder %v813, 7
    %v1274 = vsel %vm1273, %v1271, %v1272
    %v1275 = vsel %vm1273, %v1270, %v1271
    %v1276 = vsel %vm1273, %v1269, %v1270
    %v1277 = vsel %vm1273, %v1268, %v1269
    %v1278 = vsel %vm1273, %v1267, %v1268
    %v1279 = vsel %vm1273, %v1266, %v1267
    %v1280 = vsel %vm1273, %v1265, %v1266
    %v1281 = vsel %vm1273, %v1272, %v1265
    %s1282 = scalar_lea.vmem [#allocation9], 512
    %v1283 = vld [vmem:[%s1282] sm:$0xff]
    %v1284 = vld [vmem:[%s1282 + $0x8] sm:$0xff]
    %v1285 = vld [vmem:[%s1282 + $0x10] sm:$0xff]
    %v1286 = vld [vmem:[%s1282 + $0x18] sm:$0xff]
    %v1287 = vld [vmem:[%s1282 + $0x20] sm:$0xff]
    %v1288 = vld [vmem:[%s1282 + $0x28] sm:$0xff]
    %v1289 = vld [vmem:[%s1282 + $0x30] sm:$0xff]
    %v1290 = vld [vmem:[%s1282 + $0x38] sm:$0xff]
    %v1291 = vld [vmem:[%s1282 + $0x40] sm:$0xff]
    %v1292 = vld [vmem:[%s1282 + $0x48] sm:$0xff]
    %v1293 = vld [vmem:[%s1282 + $0x50] sm:$0xff]
    %v1294 = vld [vmem:[%s1282 + $0x58] sm:$0xff]
    %v1295 = vld [vmem:[%s1282 + $0x60] sm:$0xff]
    %v1296 = vld [vmem:[%s1282 + $0x68] sm:$0xff]
    %v1297 = vld [vmem:[%s1282 + $0x70] sm:$0xff]
    %v1298 = vld [vmem:[%s1282 + $0x78] sm:$0xff]
    %v1299 = vld [vmem:[%s1282 + $0x80] sm:$0xff]
    %v1300 = vld [vmem:[%s1282 + $0x88] sm:$0xff]
    %v1301 = vld [vmem:[%s1282 + $0x90] sm:$0xff]
    %v1302 = vld [vmem:[%s1282 + $0x98] sm:$0xff]
    %v1303 = vld [vmem:[%s1282 + $0xa0] sm:$0xff]
    %v1304 = vld [vmem:[%s1282 + $0xa8] sm:$0xff]
    %v1305 = vld [vmem:[%s1282 + $0xb0] sm:$0xff]
    %v1306 = vld [vmem:[%s1282 + $0xb8] sm:$0xff]
    %v1307 = vld [vmem:[%s1282 + $0xc0] sm:$0xff]
    %v1308 = vld [vmem:[%s1282 + $0xc8] sm:$0xff]
    %v1309 = vld [vmem:[%s1282 + $0xd0] sm:$0xff]
    %v1310 = vld [vmem:[%s1282 + $0xd8] sm:$0xff]
    %v1311 = vld [vmem:[%s1282 + $0xe0] sm:$0xff]
    %v1312 = vld [vmem:[%s1282 + $0xe8] sm:$0xff]
    %v1313 = vld [vmem:[%s1282 + $0xf0] sm:$0xff]
    %v1314 = vld [vmem:[%s1282 + $0xf8] sm:$0xff]
    %1315 = vmatprep.subr.mxu0 %v1314
    %1316 = vmatpush1.msra.mxu0 %v1313
    %1317 = vmatprep.subr.mxu0 %v1312
    %1318 = vmatpush1.msra.mxu0 %v1311
    %1319 = vmatprep.subr.mxu0 %v1310
    %1320 = vmatpush1.msra.mxu0 %v1309
    %1321 = vmatprep.subr.mxu0 %v1308
    %1322 = vmatpush1.msra.mxu0 %v1307
    %1323 = vmatprep.subr.mxu0 %v1306
    %1324 = vmatpush1.msra.mxu0 %v1305
    %1325 = vmatprep.subr.mxu0 %v1304
    %1326 = vmatpush1.msra.mxu0 %v1303
    %1327 = vmatprep.subr.mxu0 %v1302
    %1328 = vmatpush1.msra.mxu0 %v1301
    %1329 = vmatprep.subr.mxu0 %v1300
    %1330 = vmatpush1.msra.mxu0 %v1299
    %1331 = vmatprep.subr.mxu0 %v1298
    %1332 = vmatpush1.msra.mxu0 %v1297
    %1333 = vmatprep.subr.mxu0 %v1296
    %1334 = vmatpush1.msra.mxu0 %v1295
    %1335 = vmatprep.subr.mxu0 %v1294
    %1336 = vmatpush1.msra.mxu0 %v1293
    %1337 = vmatprep.subr.mxu0 %v1292
    %1338 = vmatpush1.msra.mxu0 %v1291
    %1339 = vmatprep.subr.mxu0 %v1290
    %1340 = vmatpush1.msra.mxu0 %v1289
    %1341 = vmatprep.subr.mxu0 %v1288
    %1342 = vmatpush1.msra.mxu0 %v1287
    %1343 = vmatprep.subr.mxu0 %v1286
    %1344 = vmatpush1.msra.mxu0 %v1285
    %1345 = vmatprep.subr.mxu0 %v1284
    %1346 = vmatpush1.msra.mxu0 %v1283
    %1347 = vmatprep.subr.mxu0 0.0
    %1348 = vmatpush2.msra.mxu0 0.0
    %1349 = vmatprep.subr.mxu0 0.0
    %1350 = vmatpush2.msra.mxu0 0.0
    %1351 = vmatprep.subr.mxu0 0.0
    %1352 = vmatpush2.msra.mxu0 0.0
    %1353 = vmatprep.subr.mxu0 0.0
    %1354 = vmatpush2.msra.mxu0 0.0
    %1355 = vmatprep.subr.mxu0 0.0
    %1356 = vmatpush2.msra.mxu0 0.0
    %1357 = vmatprep.subr.mxu0 0.0
    %1358 = vmatpush2.msra.mxu0 0.0
    %1359 = vmatprep.subr.mxu0 0.0
    %1360 = vmatpush2.msra.mxu0 0.0
    %1361 = vmatprep.subr.mxu0 0.0
    %1362 = vmatpush2.msra.mxu0 0.0
    %1363 = vmatprep.subr.mxu0 0.0
    %1364 = vmatpush2.msra.mxu0 0.0
    %1365 = vmatprep.subr.mxu0 0.0
    %1366 = vmatpush2.msra.mxu0 0.0
    %1367 = vmatprep.subr.mxu0 0.0
    %1368 = vmatpush2.msra.mxu0 0.0
    %1369 = vmatprep.subr.mxu0 0.0
    %1370 = vmatpush2.msra.mxu0 0.0
    %1371 = vmatprep.subr.mxu0 0.0
    %1372 = vmatpush2.msra.mxu0 0.0
    %1373 = vmatprep.subr.mxu0 0.0
    %1374 = vmatpush2.msra.mxu0 0.0
    %1375 = vmatprep.subr.mxu0 0.0
    %1376 = vmatpush2.msra.mxu0 0.0
    %1377 = vmatprep.subr.mxu0 0.0
    %1378 = vmatpush2.msra.mxu0 0.0
    %1379 = vmatprep.mubr.f32.mxu0 0.0
    %1380 = vmatmul.mubr.f32.gmra.mxu0 %v1280
    %v1381 = vpop.f32.mrf.mxu0
    %v1382 = vadd.f32 0.0, %v1381
    %v1383 = vpop.f32.mrf.mxu0
    %v1384 = vadd.f32 0.0, %v1383
    %1385 = vmatprep.mubr.f32.mxu0 0.0
    %1386 = vmatmul.mubr.f32.gmra.mxu0 %v1279
    %v1387 = vpop.f32.mrf.mxu0
    %v1388 = vadd.f32 0.0, %v1387
    %v1389 = vpop.f32.mrf.mxu0
    %v1390 = vadd.f32 0.0, %v1389
    %1391 = vmatprep.mubr.f32.mxu0 0.0
    %1392 = vmatmul.mubr.f32.gmra.mxu0 %v1278
    %v1393 = vpop.f32.mrf.mxu0
    %v1394 = vadd.f32 0.0, %v1393
    %v1395 = vpop.f32.mrf.mxu0
    %v1396 = vadd.f32 0.0, %v1395
    %1397 = vmatprep.mubr.f32.mxu0 0.0
    %1398 = vmatmul.mubr.f32.gmra.mxu0 %v1277
    %v1399 = vpop.f32.mrf.mxu0
    %v1400 = vadd.f32 0.0, %v1399
    %v1401 = vpop.f32.mrf.mxu0
    %v1402 = vadd.f32 0.0, %v1401
    %1403 = vmatprep.mubr.f32.mxu0 0.0
    %1404 = vmatmul.mubr.f32.gmra.mxu0 %v1276
    %v1405 = vpop.f32.mrf.mxu0
    %v1406 = vadd.f32 0.0, %v1405
    %v1407 = vpop.f32.mrf.mxu0
    %v1408 = vadd.f32 0.0, %v1407
    %1409 = vmatprep.mubr.f32.mxu0 0.0
    %1410 = vmatmul.mubr.f32.gmra.mxu0 %v1275
    %v1411 = vpop.f32.mrf.mxu0
    %v1412 = vadd.f32 0.0, %v1411
    %v1413 = vpop.f32.mrf.mxu0
    %v1414 = vadd.f32 0.0, %v1413
    %1415 = vmatprep.mubr.f32.mxu0 0.0
    %1416 = vmatmul.mubr.f32.gmra.mxu0 %v1274
    %v1417 = vpop.f32.mrf.mxu0
    %v1418 = vadd.f32 0.0, %v1417
    %v1419 = vpop.f32.mrf.mxu0
    %v1420 = vadd.f32 0.0, %v1419
    %1421 = vmatprep.mubr.f32.mxu0 0.0
    %1422 = vmatmul.mubr.f32.gmra.mxu0 %v1281
    %v1423 = vpop.f32.mrf.mxu0
    %v1424 = vadd.f32 0.0, %v1423
    %v1425 = vpop.f32.mrf.mxu0
    %v1426 = vadd.f32 0.0, %v1425
    %1427 = vdwg.mxu0
    %v1428 = vadd.f32 %v1219, %v1382
    %v1429 = vadd.f32 %v1221, %v1384
    %v1430 = vadd.f32 %v1225, %v1388
    %v1431 = vadd.f32 %v1227, %v1390
    %v1432 = vadd.f32 %v1231, %v1394
    %v1433 = vadd.f32 %v1233, %v1396
    %v1434 = vadd.f32 %v1237, %v1400
    %v1435 = vadd.f32 %v1239, %v1402
    %v1436 = vadd.f32 %v1243, %v1406
    %v1437 = vadd.f32 %v1245, %v1408
    %v1438 = vadd.f32 %v1249, %v1412
    %v1439 = vadd.f32 %v1251, %v1414
    %v1440 = vadd.f32 %v1255, %v1418
    %v1441 = vadd.f32 %v1257, %v1420
    %v1442 = vadd.f32 %v1261, %v1424
    %v1443 = vadd.f32 %v1263, %v1426
    %v1444 = vxor.u32 %v1429, 2147483648
    %v1445 = vxor.u32 %v1431, 2147483648
    %v1446 = vxor.u32 %v1433, 2147483648
    %v1447 = vxor.u32 %v1435, 2147483648
    %v1448 = vxor.u32 %v1437, 2147483648
    %v1449 = vxor.u32 %v1439, 2147483648
    %v1450 = vxor.u32 %v1441, 2147483648
    %v1451 = vxor.u32 %v1443, 2147483648
    %v1452 = vmul.f32 %v1444, 1.442695
    %v1453 = vpow.pop %v1452
    %v1454 = vmul.f32 %v1445, 1.442695
    %v1455 = vpow.pop %v1454
    %v1456 = vmul.f32 %v1446, 1.442695
    %v1457 = vpow.pop %v1456
    %v1458 = vmul.f32 %v1447, 1.442695
    %v1459 = vpow.pop %v1458
    %v1460 = vmul.f32 %v1448, 1.442695
    %v1461 = vpow.pop %v1460
    %v1462 = vmul.f32 %v1449, 1.442695
    %v1463 = vpow.pop %v1462
    %v1464 = vmul.f32 %v1450, 1.442695
    %v1465 = vpow.pop %v1464
    %v1466 = vmul.f32 %v1451, 1.442695
    %v1467 = vpow.pop %v1466
    %v1468 = vadd.f32 %v1453, 1.0
    %v1469 = vadd.f32 %v1455, 1.0
    %v1470 = vadd.f32 %v1457, 1.0
    %v1471 = vadd.f32 %v1459, 1.0
    %v1472 = vadd.f32 %v1461, 1.0
    %v1473 = vadd.f32 %v1463, 1.0
    %v1474 = vadd.f32 %v1465, 1.0
    %v1475 = vadd.f32 %v1467, 1.0
    %v1476 = vrcp.pop %v1468
    %v1477 = vmul.f32 1.0, %v1476
    %v1478 = vrcp.pop %v1469
    %v1479 = vmul.f32 1.0, %v1478
    %v1480 = vrcp.pop %v1470
    %v1481 = vmul.f32 1.0, %v1480
    %v1482 = vrcp.pop %v1471
    %v1483 = vmul.f32 1.0, %v1482
    %v1484 = vrcp.pop %v1472
    %v1485 = vmul.f32 1.0, %v1484
    %v1486 = vrcp.pop %v1473
    %v1487 = vmul.f32 1.0, %v1486
    %v1488 = vrcp.pop %v1474
    %v1489 = vmul.f32 1.0, %v1488
    %v1490 = vrcp.pop %v1475
    %v1491 = vmul.f32 1.0, %v1490
    %v1492 = vmul.f32 %v1428, %v1477
    %v1493 = vmul.f32 %v1430, %v1479
    %v1494 = vmul.f32 %v1432, %v1481
    %v1495 = vmul.f32 %v1434, %v1483
    %v1496 = vmul.f32 %v1436, %v1485
    %v1497 = vmul.f32 %v1438, %v1487
    %v1498 = vmul.f32 %v1440, %v1489
    %v1499 = vmul.f32 %v1442, %v1491
    %1500 = vst [vmem:[#allocation11] sm:$0xff] %v1492
    %1501 = vst [vmem:[#allocation11 + $0x8] sm:$0xff] %v1493
    %1502 = vst [vmem:[#allocation11 + $0x10] sm:$0xff] %v1494
    %1503 = vst [vmem:[#allocation11 + $0x18] sm:$0xff] %v1495
    %1504 = vst [vmem:[#allocation11 + $0x20] sm:$0xff] %v1496
    %1505 = vst [vmem:[#allocation11 + $0x28] sm:$0xff] %v1497
    %1506 = vst [vmem:[#allocation11 + $0x30] sm:$0xff] %v1498
    %1507 = vst [vmem:[#allocation11 + $0x38] sm:$0xff] %v1499
    // Predicated region
    $region38: #{tpu_custom_call.1} parent=1 // pred_check
      _
    $region39: #{tpu_custom_call.1} parent=1 // pred_check_branch
      %1509 = sbr.rel (0) target = $region41
    $region40: #{tpu_custom_call.1} parent=1 // pred_region
      %s1511 = ssub.s32 1024, 1024
      %1512 = vsyncadd [#allocation5], %s1511
      %s1513 = sshll.u32 [#allocation11], 4
      %s1514 = int_to_ptr.vmem [resolvable:$true] %s1513
      %1519 = dma.vmem_to_hbm [thread:$0]  %s1514, 1024, %s5, [#allocation5], 128, 128, 8
    $region41: #{tpu_custom_call.1} parent=1 // pred_fallthru
      _
    // Predicated region
    $region42: #{tpu_custom_call.1} parent=1 // pred_check
      _
    $region43: #{tpu_custom_call.1} parent=1 // pred_check_branch
      %1521 = sbr.rel (0) target = $region45
    $region44: #{tpu_custom_call.1} parent=1 // pred_region
      %1522 = dma.done [#allocation5], 1024
    $region45: #{tpu_custom_call.1} parent=1 // pred_fallthru
      _
    %1523 = vsyncpa [#allocation4], 1
    %1524 = vsyncpa [#allocation7], 1
    %1525 = vsyncpa [#allocation10], 1
    %1526 = vsyncpa [#allocation5], 1

</llo_original>
